<compile_context>
chip_gen: v7x
topology: tpu7x:2x2x1
jax: 0.10.0
libtpu: 0.0.40
codegen_flags: <defaults>
</compile_context>

<pallas_src>
import functools

import numpy as np
import jax
import jax.numpy as jnp
from jax.experimental import pallas as pl
from jax.experimental.pallas import tpu as pltpu

INPUT_DIM = 28 * 28      # 784  (784 % 8 == 0, so it is a legal sublane extent)
HIDDEN_DIM = 512
OUTPUT_DIM = 10
OUTPUT_PAD = 128         # lane-dense output tile; real logits are [:, :10]


def _round_up(x: int, m: int) -> int:
    return ((x + m - 1) // m) * m


def _mlp_kernel(x_ref, w1_ref, b1_ref, w2_ref, b2_ref, w3_ref, b3_ref, o_ref):
    """3-layer MLP forward for one batch tile (all weights resident in VMEM)."""
    cdt = w1_ref.dtype                    # MXU operand dtype (bf16 by default)
    x = x_ref[...].astype(cdt)            # cast inside kernel: no HBM pre-pass on x
    h1 = jnp.dot(x, w1_ref[...], preferred_element_type=jnp.float32)
    h1 = jnp.maximum(h1 + b1_ref[...], 0.0)           # bias + ReLU in f32 (VPU)
    h2 = jnp.dot(h1.astype(cdt), w2_ref[...], preferred_element_type=jnp.float32)
    h2 = jnp.maximum(h2 + b2_ref[...], 0.0)
    out = jnp.dot(h2.astype(cdt), w3_ref[...], preferred_element_type=jnp.float32)
    o_ref[...] = (out + b3_ref[...]).astype(o_ref.dtype)


def _choose_tile(B: int, tb: int) -> int:
    """Pick the batch tile: big tiles amortize ~0.35us/step grid overhead, but
    keep >= 2 grid steps for mid-size batches so v7x can use both TensorCores."""
    if B <= 64:
        return _round_up(B, 8)            # tiny batch: one small step is fine
    half = _round_up(-(-B // 2), 8)       # ceil(B/2), 8-aligned
    return min(tb, half)                  # guarantees grid >= 2 when B > 64


@functools.partial(jax.jit, static_argnames=("tb",))
def mlp_forward(x, w1, b1, w2, b2, w3, b3, *, tb=512):
    """x: (B, 784) float32.  Weights come from prepare_params (w3/b3 padded to
    128 output columns, weights already in the compute dtype).  Returns (B, 10)
    float32 logits."""
    B, D = x.shape
    assert D == INPUT_DIM
    assert tb % 8 == 0

    tb_eff = _choose_tile(B, tb)
    grid = ((B + tb_eff - 1) // tb_eff,)  # ragged grid; partial blocks are masked

    # Weights / biases use a constant block index -> fetched once, resident
    # across all batch tiles.
    full = lambda shape: pl.BlockSpec(shape, lambda i: (0, 0))

    w_itemsize = jnp.dtype(w1.dtype).itemsize
    weight_elems = (INPUT_DIM * HIDDEN_DIM + HIDDEN_DIM * HIDDEN_DIM
                    + HIDDEN_DIM * OUTPUT_PAD)
    flops = 2 * B * weight_elems
    bytes_accessed = (B * INPUT_DIM * 4                  # x (f32 in HBM)
                      + weight_elems * w_itemsize        # weights (bf16)
                      + (2 * HIDDEN_DIM + OUTPUT_PAD) * 4  # biases (f32)
                      + B * OUTPUT_PAD * 4)              # out (f32)

    out_padded = pl.pallas_call(
        _mlp_kernel,
        out_shape=jax.ShapeDtypeStruct((B, OUTPUT_PAD), jnp.float32),
        grid_spec=pltpu.PrefetchScalarGridSpec(
            num_scalar_prefetch=0,
            grid=grid,
            in_specs=[
                pl.BlockSpec((tb_eff, INPUT_DIM), lambda i: (i, 0)),  # x tile
                full((INPUT_DIM, HIDDEN_DIM)),                        # w1
                full((1, HIDDEN_DIM)),                                # b1
                full((HIDDEN_DIM, HIDDEN_DIM)),                       # w2
                full((1, HIDDEN_DIM)),                                # b2
                full((HIDDEN_DIM, OUTPUT_PAD)),                       # w3 (padded N)
                full((1, OUTPUT_PAD)),                                # b3 (padded N)
            ],
            out_specs=pl.BlockSpec((tb_eff, OUTPUT_PAD), lambda i: (i, 0)),
        ),
        compiler_params=pltpu.CompilerParams(
            dimension_semantics=("parallel",),
            vmem_limit_bytes=32 << 20,     # ~10 MiB actually used at tb=512 bf16
        ),
        cost_estimate=pl.CostEstimate(
            flops=flops, transcendentals=0, bytes_accessed=bytes_accessed),
    )(x, w1, b1, w2, b2, w3, b3)

    return out_padded[:, :OUTPUT_DIM]


def prepare_params(params, compute_dtype=jnp.bfloat16):
    """One-time (hoisted out of the forward pass) weight prep:
    pad w3/b3 to 128 output columns and cast weights to the MXU compute dtype.
    Biases stay f32 (bias + ReLU are done in f32 inside the kernel)."""
    w1, b1, w2, b2, w3, b3 = params
    w1_c = w1.astype(compute_dtype)
    w2_c = w2.astype(compute_dtype)
    w3_c = jnp.pad(w3, ((0, 0), (0, OUTPUT_PAD - OUTPUT_DIM))).astype(compute_dtype)
    b3_p = jnp.pad(b3, ((0, 0), (0, OUTPUT_PAD - OUTPUT_DIM)))
    return w1_c, b1, w2_c, b2, w3_c, b3_p


def init_params(key):
    """Deterministic init mimicking torch.nn.Linear default U(-1/sqrt(fan_in), 1/sqrt(fan_in))."""
    k1, k2, k3, k4, k5, k6 = jax.random.split(key, 6)

    def lin(kw, kb, fan_in, fan_out):
        bound = 1.0 / jnp.sqrt(jnp.float32(fan_in))
        w = jax.random.uniform(kw, (fan_in, fan_out), jnp.float32, -bound, bound)
        b = jax.random.uniform(kb, (1, fan_out), jnp.float32, -bound, bound)
        return w, b

    w1, b1 = lin(k1, k2, INPUT_DIM, HIDDEN_DIM)
    w2, b2 = lin(k3, k4, HIDDEN_DIM, HIDDEN_DIM)
    w3, b3 = lin(k5, k6, HIDDEN_DIM, OUTPUT_DIM)
    return w1, b1, w2, b2, w3, b3


def reference_forward(x, w1, b1, w2, b2, w3, b3):
    h1 = jnp.maximum(x @ w1 + b1, 0.0)
    h2 = jnp.maximum(h1 @ w2 + b2, 0.0)
    return h2 @ w3 + b3


# TODO(synk): the PyTorch module also constructs an Adam optimizer; only the
# forward pass is implemented here.

if __name__ == "__main__":
    key = jax.random.PRNGKey(0)
    kx, kx2, kp = jax.random.split(key, 3)
    params = init_params(kp)                    # f32 reference parameters
    kparams = prepare_params(params)            # one-time pad + bf16 cast

    # Small demo batch: single grid step, tile clamps to 32.
    x_small = jax.random.normal(kx, (32, INPUT_DIM), jnp.float32)
    out_small = jax.block_until_ready(mlp_forward(x_small, *kparams))
    ref_small = reference_forward(x_small, *params)
    assert out_small.shape == (32, OUTPUT_DIM)
    assert jnp.allclose(out_small, ref_small, atol=5e-2, rtol=5e-2), \
        "mismatch (small batch)"

    # Ragged batch: exercises the ragged 2-step grid (tile 152, partial last
    # block masked) so v7x can use both TensorCores.
    x_big = jax.random.normal(kx2, (300, INPUT_DIM), jnp.float32)
    out_big = jax.block_until_ready(mlp_forward(x_big, *kparams))
    ref_big = reference_forward(x_big, *params)
    assert out_big.shape == (300, OUTPUT_DIM)
    assert jnp.allclose(out_big, ref_big, atol=5e-2, rtol=5e-2), \
        "mismatch (ragged batch)"

    print("KERNEL_OK")
</pallas_src>

<mosaic_0001>
module attributes {stable_mosaic.version = 11 : i64} {
  func.func @_mlp_kernel(%arg0: i32, %arg1: memref<32x784xf32, #tpu.memory_space<vmem>>, %arg2: memref<784x512xbf16, #tpu.memory_space<vmem>>, %arg3: memref<1x512xf32, #tpu.memory_space<vmem>>, %arg4: memref<512x512xbf16, #tpu.memory_space<vmem>>, %arg5: memref<1x512xf32, #tpu.memory_space<vmem>>, %arg6: memref<512x128xbf16, #tpu.memory_space<vmem>>, %arg7: memref<1x128xf32, #tpu.memory_space<vmem>>, %arg8: memref<32x128xf32, #tpu.memory_space<vmem>>) attributes {dimension_semantics = [#tpu.dimension_semantics<parallel>], iteration_bounds = array<i64: 1>, scalar_prefetch = 0 : i64, scratch_operands = 0 : i64, tpu.core_type = #tpu.core_type<tc>, window_params = [{transform_indices = @transform_0, window_bounds = array<i64: 32, 784>}, {pipeline_mode = #tpu.pipeline_mode<synchronous>, transform_indices = @transform_1, window_bounds = array<i64: 784, 512>}, {pipeline_mode = #tpu.pipeline_mode<synchronous>, transform_indices = @transform_2, window_bounds = array<i64: 1, 512>}, {pipeline_mode = #tpu.pipeline_mode<synchronous>, transform_indices = @transform_3, window_bounds = array<i64: 512, 512>}, {pipeline_mode = #tpu.pipeline_mode<synchronous>, transform_indices = @transform_4, window_bounds = array<i64: 1, 512>}, {pipeline_mode = #tpu.pipeline_mode<synchronous>, transform_indices = @transform_5, window_bounds = array<i64: 512, 128>}, {pipeline_mode = #tpu.pipeline_mode<synchronous>, transform_indices = @transform_6, window_bounds = array<i64: 1, 128>}, {transform_indices = @transform_7, window_bounds = array<i64: 32, 128>}]} {
    %c0 = arith.constant 0 : index
    %c0_0 = arith.constant 0 : index
    %0 = vector.load %arg1[%c0, %c0_0] : memref<32x784xf32, #tpu.memory_space<vmem>>, vector<32x784xf32>
    %1 = arith.truncf %0 : vector<32x784xf32> to vector<32x784xbf16>
    %c0_1 = arith.constant 0 : index
    %c0_2 = arith.constant 0 : index
    %2 = vector.load %arg2[%c0_1, %c0_2] : memref<784x512xbf16, #tpu.memory_space<vmem>>, vector<784x512xbf16>
    %cst = arith.constant dense<0.000000e+00> : vector<32x512xf32>
    %3 = tpu.matmul %1, %2, %cst {dimension_numbers = #tpu.dot_dimension_numbers<[1], [0], [0], [1], [0, 0, 1, 1], [], []>} : vector<32x784xbf16>, vector<784x512xbf16>, vector<32x512xf32> -> vector<32x512xf32>
    %c0_3 = arith.constant 0 : index
    %c0_4 = arith.constant 0 : index
    %4 = vector.load %arg3[%c0_3, %c0_4] : memref<1x512xf32, #tpu.memory_space<vmem>>, vector<1x512xf32>
    %5 = vector.broadcast %4 : vector<1x512xf32> to vector<32x512xf32>
    %6 = arith.addf %3, %5 : vector<32x512xf32>
    %cst_5 = arith.constant 0.000000e+00 : f32
    %7 = vector.broadcast %cst_5 : f32 to vector<32x512xf32>
    %8 = arith.maximumf %6, %7 : vector<32x512xf32>
    %9 = arith.truncf %8 : vector<32x512xf32> to vector<32x512xbf16>
    %c0_6 = arith.constant 0 : index
    %c0_7 = arith.constant 0 : index
    %10 = vector.load %arg4[%c0_6, %c0_7] : memref<512x512xbf16, #tpu.memory_space<vmem>>, vector<512x512xbf16>
    %cst_8 = arith.constant dense<0.000000e+00> : vector<32x512xf32>
    %11 = tpu.matmul %9, %10, %cst_8 {dimension_numbers = #tpu.dot_dimension_numbers<[1], [0], [0], [1], [0, 0, 1, 1], [], []>} : vector<32x512xbf16>, vector<512x512xbf16>, vector<32x512xf32> -> vector<32x512xf32>
    %c0_9 = arith.constant 0 : index
    %c0_10 = arith.constant 0 : index
    %12 = vector.load %arg5[%c0_9, %c0_10] : memref<1x512xf32, #tpu.memory_space<vmem>>, vector<1x512xf32>
    %13 = vector.broadcast %12 : vector<1x512xf32> to vector<32x512xf32>
    %14 = arith.addf %11, %13 : vector<32x512xf32>
    %cst_11 = arith.constant 0.000000e+00 : f32
    %15 = vector.broadcast %cst_11 : f32 to vector<32x512xf32>
    %16 = arith.maximumf %14, %15 : vector<32x512xf32>
    %17 = arith.truncf %16 : vector<32x512xf32> to vector<32x512xbf16>
    %c0_12 = arith.constant 0 : index
    %c0_13 = arith.constant 0 : index
    %18 = vector.load %arg6[%c0_12, %c0_13] : memref<512x128xbf16, #tpu.memory_space<vmem>>, vector<512x128xbf16>
    %cst_14 = arith.constant dense<0.000000e+00> : vector<32x128xf32>
    %19 = tpu.matmul %17, %18, %cst_14 {dimension_numbers = #tpu.dot_dimension_numbers<[1], [0], [0], [1], [0, 0, 1, 1], [], []>} : vector<32x512xbf16>, vector<512x128xbf16>, vector<32x128xf32> -> vector<32x128xf32>
    %c0_15 = arith.constant 0 : index
    %c0_16 = arith.constant 0 : index
    %20 = vector.load %arg7[%c0_15, %c0_16] : memref<1x128xf32, #tpu.memory_space<vmem>>, vector<1x128xf32>
    %21 = vector.broadcast %20 : vector<1x128xf32> to vector<32x128xf32>
    %22 = arith.addf %19, %21 : vector<32x128xf32>
    %c0_17 = arith.constant 0 : index
    %c0_18 = arith.constant 0 : index
    %23 = vector.load %arg8[%c0_17, %c0_18] : memref<32x128xf32, #tpu.memory_space<vmem>>, vector<32x128xf32>
    tpu.vector_store %arg8[%c0_17, %c0_18], %22 {strides = array<i32>} : memref<32x128xf32, #tpu.memory_space<vmem>>, vector<32x128xf32>,
    return
  }
  func.func @transform_0(%arg0: i32) -> (i32, i32) {
    %c0_i32 = arith.constant 0 : i32
    %c0_i32_0 = arith.constant 0 : i32
    return %arg0, %c0_i32 : i32, i32
  }
  func.func @transform_1(%arg0: i32) -> (i32, i32) {
    %c0_i32 = arith.constant 0 : i32
    %c0_i32_0 = arith.constant 0 : i32
    %c0_i32_1 = arith.constant 0 : i32
    return %c0_i32, %c0_i32_0 : i32, i32
  }
  func.func @transform_2(%arg0: i32) -> (i32, i32) {
    %c0_i32 = arith.constant 0 : i32
    %c0_i32_0 = arith.constant 0 : i32
    %c0_i32_1 = arith.constant 0 : i32
    return %c0_i32, %c0_i32_0 : i32, i32
  }
  func.func @transform_3(%arg0: i32) -> (i32, i32) {
    %c0_i32 = arith.constant 0 : i32
    %c0_i32_0 = arith.constant 0 : i32
    %c0_i32_1 = arith.constant 0 : i32
    return %c0_i32, %c0_i32_0 : i32, i32
  }
  func.func @transform_4(%arg0: i32) -> (i32, i32) {
    %c0_i32 = arith.constant 0 : i32
    %c0_i32_0 = arith.constant 0 : i32
    %c0_i32_1 = arith.constant 0 : i32
    return %c0_i32, %c0_i32_0 : i32, i32
  }
  func.func @transform_5(%arg0: i32) -> (i32, i32) {
    %c0_i32 = arith.constant 0 : i32
    %c0_i32_0 = arith.constant 0 : i32
    %c0_i32_1 = arith.constant 0 : i32
    return %c0_i32, %c0_i32_0 : i32, i32
  }
  func.func @transform_6(%arg0: i32) -> (i32, i32) {
    %c0_i32 = arith.constant 0 : i32
    %c0_i32_0 = arith.constant 0 : i32
    %c0_i32_1 = arith.constant 0 : i32
    return %c0_i32, %c0_i32_0 : i32, i32
  }
  func.func @transform_7(%arg0: i32) -> (i32, i32) {
    %c0_i32 = arith.constant 0 : i32
    %c0_i32_0 = arith.constant 0 : i32
    return %arg0, %c0_i32 : i32, i32
  }
}

</mosaic_0001>

<llo_original>
// kernel: mlp_forward.1
$region0: #{mlp_forward.1}
  #allocation0 [shape = 'u32[]', space=smem, size = 0x4, offset = 0x4, fixed_abs, tag = 'smem constant byte address 0x4 - core index']
  #allocation1 [shape = 'u32[144,128]{1,0:T(1,128)}', space=vmem, size = 0x12000, scoped, tag = 'internal scratch']
  %s0 = inlined_call_operand.hbm [shape: f32[32,784], index: 0, kind: input, shape index: {}]
  %s1 = inlined_call_operand.hbm [shape: bf16[784,512], index: 1, kind: input, shape index: {}]
  %s2 = inlined_call_operand.vmem [shape: f32[1,512], index: 2, kind: input, shape index: {}]
  %s3 = inlined_call_operand.hbm [shape: bf16[512,512], index: 3, kind: input, shape index: {}]
  %s4 = inlined_call_operand.vmem [shape: f32[1,512], index: 4, kind: input, shape index: {}]
  %s5 = inlined_call_operand.hbm [shape: bf16[512,128], index: 5, kind: input, shape index: {}]
  %s6 = inlined_call_operand.vmem [shape: f32[1,128], index: 6, kind: input, shape index: {}]
  %s7 = inlined_call_operand.vmem [shape: f32[32,128], index: 7, kind: output, shape index: {}]
  %s8 = sld [smem:[#allocation0]]
  $region54: #{mlp_forward.1} parent=0
    _
  %s10 = ssub.s32 1, %s8
  %s11 = scalar_select 0, %s10, %s8
  $region1: #{mlp_forward.1} parent=0
    #allocation2 [shape = 'u8[114688]{0}', space=vmem, size = 0x1c000, scoped, tag = 'input window, operand 0, single buffered']
    #allocation3 [shape = 's32[1]{0}', space=sflag, size = 0x4, scoped, tag = 'scoped memory for mlp_forward.1']
    #allocation4 [shape = 'u8[802816]{0}', space=vmem, size = 0xc4000, scoped, tag = 'input window, operand 1, single buffered']
    #allocation5 [shape = 's32[1]{0}', space=sflag, size = 0x4, scoped, tag = 'scoped memory for mlp_forward.1']
    #allocation6 [shape = 'u8[524288]{0}', space=vmem, size = 0x80000, scoped, tag = 'input window, operand 3, single buffered']
    #allocation7 [shape = 'u8[131072]{0}', space=vmem, size = 0x20000, scoped, tag = 'input window, operand 5, single buffered']
    #allocation8 [shape = 's32[1]{0}', space=sflag, size = 0x4, scoped, tag = 'scoped memory for mlp_forward.1']
    %12 = vsyncpa [#allocation3], 0
    %13 = vsyncpa [#allocation5], 0
    %14 = vsyncpa [#allocation8], 0
    // Predicated region
    $region2: #{mlp_forward.1} parent=1 // pred_check
      _
    $region3: #{mlp_forward.1} parent=1 // pred_check_branch
      %16 = sbr.rel (0) target = $region5
    $region4: #{mlp_forward.1} parent=1 // pred_region
      %s18 = ssub.s32 3584, 3584
      %19 = vsyncadd [#allocation3], %s18
      %s20 = sshll.u32 [#allocation2], 4
      %s21 = int_to_ptr.vmem [resolvable:$true] %s20
      %26 = dma.hbm_to_vmem [thread:$0]  %s0, 3584, %s21, [#allocation3], 896, 896, 56
    $region5: #{mlp_forward.1} parent=1 // pred_fallthru
      _
    // Predicated region
    $region6: #{mlp_forward.1} parent=1 // pred_check
      _
    $region7: #{mlp_forward.1} parent=1 // pred_check_branch
      %28 = sbr.rel (0) target = $region9
    $region8: #{mlp_forward.1} parent=1 // pred_region
      %s30 = ssub.s32 25088, 25088
      %31 = vsyncadd [#allocation5], %s30
      %s32 = sshll.u32 [#allocation4], 4
      %s33 = int_to_ptr.vmem [resolvable:$true] %s32
      %38 = dma.hbm_to_vmem [thread:$0]  %s1, 25088, %s33, [#allocation5], 256, 256, 16
    $region9: #{mlp_forward.1} parent=1 // pred_fallthru
      _
    // Predicated region
    $region10: #{mlp_forward.1} parent=1 // pred_check
      _
    $region11: #{mlp_forward.1} parent=1 // pred_check_branch
      %40 = sbr.rel (0) target = $region13
    $region12: #{mlp_forward.1} parent=1 // pred_region
      _
    $region13: #{mlp_forward.1} parent=1 // pred_fallthru
      _
    // Predicated region
    $region14: #{mlp_forward.1} parent=1 // pred_check
      _
    $region15: #{mlp_forward.1} parent=1 // pred_check_branch
      %42 = sbr.rel (0) target = $region17
    $region16: #{mlp_forward.1} parent=1 // pred_region
      %s44 = ssub.s32 16384, 16384
      %45 = vsyncadd [#allocation5], %s44
      %s46 = sshll.u32 [#allocation6], 4
      %s47 = int_to_ptr.vmem [resolvable:$true] %s46
      %52 = dma.hbm_to_vmem [thread:$0]  %s3, 16384, %s47, [#allocation5], 256, 256, 16
    $region17: #{mlp_forward.1} parent=1 // pred_fallthru
      _
    // Predicated region
    $region18: #{mlp_forward.1} parent=1 // pred_check
      _
    $region19: #{mlp_forward.1} parent=1 // pred_check_branch
      %54 = sbr.rel (0) target = $region21
    $region20: #{mlp_forward.1} parent=1 // pred_region
      _
    $region21: #{mlp_forward.1} parent=1 // pred_fallthru
      _
    // Predicated region
    $region22: #{mlp_forward.1} parent=1 // pred_check
      _
    $region23: #{mlp_forward.1} parent=1 // pred_check_branch
      %56 = sbr.rel (0) target = $region25
    $region24: #{mlp_forward.1} parent=1 // pred_region
      %s58 = ssub.s32 4096, 4096
      %59 = vsyncadd [#allocation8], %s58
      %s60 = sshll.u32 [#allocation7], 4
      %s61 = int_to_ptr.vmem [resolvable:$true] %s60
      %66 = dma.hbm_to_vmem [thread:$0]  %s5, 4096, %s61, [#allocation8], 64, 64, 4
    $region25: #{mlp_forward.1} parent=1 // pred_fallthru
      _
    // Predicated region
    $region26: #{mlp_forward.1} parent=1 // pred_check
      _
    $region27: #{mlp_forward.1} parent=1 // pred_check_branch
      %68 = sbr.rel (0) target = $region29
    $region28: #{mlp_forward.1} parent=1 // pred_region
      _
    $region29: #{mlp_forward.1} parent=1 // pred_fallthru
      _
    // Predicated region
    $region30: #{mlp_forward.1} parent=1 // pred_check
      _
    $region31: #{mlp_forward.1} parent=1 // pred_check_branch
      %70 = sbr.rel (0) target = $region33
    $region32: #{mlp_forward.1} parent=1 // pred_region
      %71 = dma.done [#allocation3], 3584
    $region33: #{mlp_forward.1} parent=1 // pred_fallthru
      _
    // Predicated region
    $region34: #{mlp_forward.1} parent=1 // pred_check
      _
    $region35: #{mlp_forward.1} parent=1 // pred_check_branch
      %73 = sbr.rel (0) target = $region37
    $region36: #{mlp_forward.1} parent=1 // pred_region
      %74 = dma.done [#allocation5], 25088
    $region37: #{mlp_forward.1} parent=1 // pred_fallthru
      _
    // Predicated region
    $region38: #{mlp_forward.1} parent=1 // pred_check
      _
    $region39: #{mlp_forward.1} parent=1 // pred_check_branch
      %76 = sbr.rel (0) target = $region41
    $region40: #{mlp_forward.1} parent=1 // pred_region
      %77 = dma.done [#allocation5], 16384
    $region41: #{mlp_forward.1} parent=1 // pred_fallthru
      _
    // Predicated region
    $region42: #{mlp_forward.1} parent=1 // pred_check
      _
    $region43: #{mlp_forward.1} parent=1 // pred_check_branch
      %79 = sbr.rel (0) target = $region45
    $region44: #{mlp_forward.1} parent=1 // pred_region
      %80 = dma.done [#allocation8], 4096
    $region45: #{mlp_forward.1} parent=1 // pred_fallthru
      _
    %v82 = vld [vmem:[#allocation2] sm:$0xff]
    %v83 = vld [vmem:[#allocation2 + $0x8] sm:$0xff]
    %v84 = vld [vmem:[#allocation2 + $0x10] sm:$0xff]
    %v85 = vld [vmem:[#allocation2 + $0x18] sm:$0xff]
    %v86 = vld [vmem:[#allocation2 + $0x20] sm:$0xff]
    %v87 = vld [vmem:[#allocation2 + $0x28] sm:$0xff]
    %v88 = vld [vmem:[#allocation2 + $0x30] sm:$0xff]
    %v89 = vld [vmem:[#allocation2 + $0x38] sm:$0xff]
    %v90 = vld [vmem:[#allocation2 + $0x40] sm:$0xff]
    %v91 = vld [vmem:[#allocation2 + $0x48] sm:$0xff]
    %v92 = vld [vmem:[#allocation2 + $0x50] sm:$0xff]
    %v93 = vld [vmem:[#allocation2 + $0x58] sm:$0xff]
    %v94 = vld [vmem:[#allocation2 + $0x60] sm:$0xff]
    %v95 = vld [vmem:[#allocation2 + $0x68] sm:$0xff]
    %v96 = vld [vmem:[#allocation2 + $0x70] sm:$0xff]
    %v97 = vld [vmem:[#allocation2 + $0x78] sm:$0xff]
    %v98 = vld [vmem:[#allocation2 + $0x80] sm:$0xff]
    %v99 = vld [vmem:[#allocation2 + $0x88] sm:$0xff]
    %v100 = vld [vmem:[#allocation2 + $0x90] sm:$0xff]
    %v101 = vld [vmem:[#allocation2 + $0x98] sm:$0xff]
    %v102 = vld [vmem:[#allocation2 + $0xa0] sm:$0xff]
    %v103 = vld [vmem:[#allocation2 + $0xa8] sm:$0xff]
    %v104 = vld [vmem:[#allocation2 + $0xb0] sm:$0xff]
    %v105 = vld [vmem:[#allocation2 + $0xb8] sm:$0xff]
    %v106 = vld [vmem:[#allocation2 + $0xc0] sm:$0xff]
    %v107 = vld [vmem:[#allocation2 + $0xc8] sm:$0xff]
    %v108 = vld [vmem:[#allocation2 + $0xd0] sm:$0xff]
    %v109 = vld [vmem:[#allocation2 + $0xd8] sm:$0xff]
    %v110 = vpack.c.bf16 %v89, %v82
    %v111 = vpack.c.bf16 %v90, %v83
    %v112 = vpack.c.bf16 %v91, %v84
    %v113 = vpack.c.bf16 %v92, %v85
    %v114 = vpack.c.bf16 %v93, %v86
    %v115 = vpack.c.bf16 %v94, %v87
    %v116 = vpack.c.bf16 %v95, %v88
    %v117 = vpack.c.bf16 %v103, %v96
    %v118 = vpack.c.bf16 %v104, %v97
    %v119 = vpack.c.bf16 %v105, %v98
    %v120 = vpack.c.bf16 %v106, %v99
    %v121 = vpack.c.bf16 %v107, %v100
    %v122 = vpack.c.bf16 %v108, %v101
    %v123 = vpack.c.bf16 %v109, %v102
    %v124 = vld [vmem:[#allocation4] sm:$0xff]
    %v125 = vld [vmem:[#allocation4 + $0x8] sm:$0xff]
    %v126 = vld [vmem:[#allocation4 + $0x10] sm:$0xff]
    %v127 = vld [vmem:[#allocation4 + $0x18] sm:$0xff]
    %v128 = vld [vmem:[#allocation4 + $0x20] sm:$0xff]
    %v129 = vld [vmem:[#allocation4 + $0x28] sm:$0xff]
    %v130 = vld [vmem:[#allocation4 + $0x30] sm:$0xff]
    %v131 = vld [vmem:[#allocation4 + $0x38] sm:$0xff]
    %v132 = vld [vmem:[#allocation4 + $0x40] sm:$0xff]
    %v133 = vld [vmem:[#allocation4 + $0x48] sm:$0xff]
    %v134 = vld [vmem:[#allocation4 + $0x50] sm:$0xff]
    %v135 = vld [vmem:[#allocation4 + $0x58] sm:$0xff]
    %v136 = vld [vmem:[#allocation4 + $0x60] sm:$0xff]
    %v137 = vld [vmem:[#allocation4 + $0x68] sm:$0xff]
    %v138 = vld [vmem:[#allocation4 + $0x70] sm:$0xff]
    %v139 = vld [vmem:[#allocation4 + $0x78] sm:$0xff]
    %v140 = vld [vmem:[#allocation4 + $0x80] sm:$0xff]
    %v141 = vld [vmem:[#allocation4 + $0x88] sm:$0xff]
    %v142 = vld [vmem:[#allocation4 + $0x90] sm:$0xff]
    %v143 = vld [vmem:[#allocation4 + $0x98] sm:$0xff]
    %v144 = vld [vmem:[#allocation4 + $0xa0] sm:$0xff]
    %v145 = vld [vmem:[#allocation4 + $0xa8] sm:$0xff]
    %v146 = vld [vmem:[#allocation4 + $0xb0] sm:$0xff]
    %v147 = vld [vmem:[#allocation4 + $0xb8] sm:$0xff]
    %v148 = vld [vmem:[#allocation4 + $0xc0] sm:$0xff]
    %v149 = vld [vmem:[#allocation4 + $0xc8] sm:$0xff]
    %v150 = vld [vmem:[#allocation4 + $0xd0] sm:$0xff]
    %v151 = vld [vmem:[#allocation4 + $0xd8] sm:$0xff]
    %v152 = vld [vmem:[#allocation4 + $0xe0] sm:$0xff]
    %v153 = vld [vmem:[#allocation4 + $0xe8] sm:$0xff]
    %v154 = vld [vmem:[#allocation4 + $0xf0] sm:$0xff]
    %v155 = vld [vmem:[#allocation4 + $0xf8] sm:$0xff]
    %v156 = vld [vmem:[#allocation4 + $0x100] sm:$0xff]
    %v157 = vld [vmem:[#allocation4 + $0x108] sm:$0xff]
    %v158 = vld [vmem:[#allocation4 + $0x110] sm:$0xff]
    %v159 = vld [vmem:[#allocation4 + $0x118] sm:$0xff]
    %v160 = vld [vmem:[#allocation4 + $0x120] sm:$0xff]
    %v161 = vld [vmem:[#allocation4 + $0x128] sm:$0xff]
    %v162 = vld [vmem:[#allocation4 + $0x130] sm:$0xff]
    %v163 = vld [vmem:[#allocation4 + $0x138] sm:$0xff]
    %v164 = vld [vmem:[#allocation4 + $0x140] sm:$0xff]
    %v165 = vld [vmem:[#allocation4 + $0x148] sm:$0xff]
    %v166 = vld [vmem:[#allocation4 + $0x150] sm:$0xff]
    %v167 = vld [vmem:[#allocation4 + $0x158] sm:$0xff]
    %v168 = vld [vmem:[#allocation4 + $0x160] sm:$0xff]
    %v169 = vld [vmem:[#allocation4 + $0x168] sm:$0xff]
    %v170 = vld [vmem:[#allocation4 + $0x170] sm:$0xff]
    %v171 = vld [vmem:[#allocation4 + $0x178] sm:$0xff]
    %v172 = vld [vmem:[#allocation4 + $0x180] sm:$0xff]
    %v173 = vld [vmem:[#allocation4 + $0x188] sm:$0xff]
    %v174 = vld [vmem:[#allocation4 + $0x190] sm:$0xff]
    %v175 = vld [vmem:[#allocation4 + $0x198] sm:$0xff]
    %v176 = vld [vmem:[#allocation4 + $0x1a0] sm:$0xff]
    %v177 = vld [vmem:[#allocation4 + $0x1a8] sm:$0xff]
    %v178 = vld [vmem:[#allocation4 + $0x1b0] sm:$0xff]
    %v179 = vld [vmem:[#allocation4 + $0x1b8] sm:$0xff]
    %v180 = vld [vmem:[#allocation4 + $0x1c0] sm:$0xff]
    %v181 = vld [vmem:[#allocation4 + $0x1c8] sm:$0xff]
    %v182 = vld [vmem:[#allocation4 + $0x1d0] sm:$0xff]
    %v183 = vld [vmem:[#allocation4 + $0x1d8] sm:$0xff]
    %v184 = vld [vmem:[#allocation4 + $0x1e0] sm:$0xff]
    %v185 = vld [vmem:[#allocation4 + $0x1e8] sm:$0xff]
    %v186 = vld [vmem:[#allocation4 + $0x1f0] sm:$0xff]
    %v187 = vld [vmem:[#allocation4 + $0x1f8] sm:$0xff]
    %v188 = vld [vmem:[#allocation4 + $0x200] sm:$0xff]
    %v189 = vld [vmem:[#allocation4 + $0x208] sm:$0xff]
    %v190 = vld [vmem:[#allocation4 + $0x210] sm:$0xff]
    %v191 = vld [vmem:[#allocation4 + $0x218] sm:$0xff]
    %v192 = vld [vmem:[#allocation4 + $0x220] sm:$0xff]
    %v193 = vld [vmem:[#allocation4 + $0x228] sm:$0xff]
    %v194 = vld [vmem:[#allocation4 + $0x230] sm:$0xff]
    %v195 = vld [vmem:[#allocation4 + $0x238] sm:$0xff]
    %v196 = vld [vmem:[#allocation4 + $0x240] sm:$0xff]
    %v197 = vld [vmem:[#allocation4 + $0x248] sm:$0xff]
    %v198 = vld [vmem:[#allocation4 + $0x250] sm:$0xff]
    %v199 = vld [vmem:[#allocation4 + $0x258] sm:$0xff]
    %v200 = vld [vmem:[#allocation4 + $0x260] sm:$0xff]
    %v201 = vld [vmem:[#allocation4 + $0x268] sm:$0xff]
    %v202 = vld [vmem:[#allocation4 + $0x270] sm:$0xff]
    %v203 = vld [vmem:[#allocation4 + $0x278] sm:$0xff]
    %v204 = vld [vmem:[#allocation4 + $0x280] sm:$0xff]
    %v205 = vld [vmem:[#allocation4 + $0x288] sm:$0xff]
    %v206 = vld [vmem:[#allocation4 + $0x290] sm:$0xff]
    %v207 = vld [vmem:[#allocation4 + $0x298] sm:$0xff]
    %v208 = vld [vmem:[#allocation4 + $0x2a0] sm:$0xff]
    %v209 = vld [vmem:[#allocation4 + $0x2a8] sm:$0xff]
    %v210 = vld [vmem:[#allocation4 + $0x2b0] sm:$0xff]
    %v211 = vld [vmem:[#allocation4 + $0x2b8] sm:$0xff]
    %v212 = vld [vmem:[#allocation4 + $0x2c0] sm:$0xff]
    %v213 = vld [vmem:[#allocation4 + $0x2c8] sm:$0xff]
    %v214 = vld [vmem:[#allocation4 + $0x2d0] sm:$0xff]
    %v215 = vld [vmem:[#allocation4 + $0x2d8] sm:$0xff]
    %v216 = vld [vmem:[#allocation4 + $0x2e0] sm:$0xff]
    %v217 = vld [vmem:[#allocation4 + $0x2e8] sm:$0xff]
    %v218 = vld [vmem:[#allocation4 + $0x2f0] sm:$0xff]
    %v219 = vld [vmem:[#allocation4 + $0x2f8] sm:$0xff]
    %v220 = vld [vmem:[#allocation4 + $0x300] sm:$0xff]
    %v221 = vld [vmem:[#allocation4 + $0x308] sm:$0xff]
    %v222 = vld [vmem:[#allocation4 + $0x310] sm:$0xff]
    %v223 = vld [vmem:[#allocation4 + $0x318] sm:$0xff]
    %v224 = vld [vmem:[#allocation4 + $0x320] sm:$0xff]
    %v225 = vld [vmem:[#allocation4 + $0x328] sm:$0xff]
    %v226 = vld [vmem:[#allocation4 + $0x330] sm:$0xff]
    %v227 = vld [vmem:[#allocation4 + $0x338] sm:$0xff]
    %v228 = vld [vmem:[#allocation4 + $0x340] sm:$0xff]
    %v229 = vld [vmem:[#allocation4 + $0x348] sm:$0xff]
    %v230 = vld [vmem:[#allocation4 + $0x350] sm:$0xff]
    %v231 = vld [vmem:[#allocation4 + $0x358] sm:$0xff]
    %v232 = vld [vmem:[#allocation4 + $0x360] sm:$0xff]
    %v233 = vld [vmem:[#allocation4 + $0x368] sm:$0xff]
    %v234 = vld [vmem:[#allocation4 + $0x370] sm:$0xff]
    %v235 = vld [vmem:[#allocation4 + $0x378] sm:$0xff]
    %v236 = vld [vmem:[#allocation4 + $0x380] sm:$0xff]
    %v237 = vld [vmem:[#allocation4 + $0x388] sm:$0xff]
    %v238 = vld [vmem:[#allocation4 + $0x390] sm:$0xff]
    %v239 = vld [vmem:[#allocation4 + $0x398] sm:$0xff]
    %v240 = vld [vmem:[#allocation4 + $0x3a0] sm:$0xff]
    %v241 = vld [vmem:[#allocation4 + $0x3a8] sm:$0xff]
    %v242 = vld [vmem:[#allocation4 + $0x3b0] sm:$0xff]
    %v243 = vld [vmem:[#allocation4 + $0x3b8] sm:$0xff]
    %v244 = vld [vmem:[#allocation4 + $0x3c0] sm:$0xff]
    %v245 = vld [vmem:[#allocation4 + $0x3c8] sm:$0xff]
    %v246 = vld [vmem:[#allocation4 + $0x3d0] sm:$0xff]
    %v247 = vld [vmem:[#allocation4 + $0x3d8] sm:$0xff]
    %v248 = vld [vmem:[#allocation4 + $0x3e0] sm:$0xff]
    %v249 = vld [vmem:[#allocation4 + $0x3e8] sm:$0xff]
    %v250 = vld [vmem:[#allocation4 + $0x3f0] sm:$0xff]
    %v251 = vld [vmem:[#allocation4 + $0x3f8] sm:$0xff]
    %v252 = vld [vmem:[#allocation4 + $0x400] sm:$0xff]
    %v253 = vld [vmem:[#allocation4 + $0x408] sm:$0xff]
    %v254 = vld [vmem:[#allocation4 + $0x410] sm:$0xff]
    %v255 = vld [vmem:[#allocation4 + $0x418] sm:$0xff]
    %v256 = vld [vmem:[#allocation4 + $0x420] sm:$0xff]
    %v257 = vld [vmem:[#allocation4 + $0x428] sm:$0xff]
    %v258 = vld [vmem:[#allocation4 + $0x430] sm:$0xff]
    %v259 = vld [vmem:[#allocation4 + $0x438] sm:$0xff]
    %v260 = vld [vmem:[#allocation4 + $0x440] sm:$0xff]
    %v261 = vld [vmem:[#allocation4 + $0x448] sm:$0xff]
    %v262 = vld [vmem:[#allocation4 + $0x450] sm:$0xff]
    %v263 = vld [vmem:[#allocation4 + $0x458] sm:$0xff]
    %v264 = vld [vmem:[#allocation4 + $0x460] sm:$0xff]
    %v265 = vld [vmem:[#allocation4 + $0x468] sm:$0xff]
    %v266 = vld [vmem:[#allocation4 + $0x470] sm:$0xff]
    %v267 = vld [vmem:[#allocation4 + $0x478] sm:$0xff]
    %v268 = vld [vmem:[#allocation4 + $0x480] sm:$0xff]
    %v269 = vld [vmem:[#allocation4 + $0x488] sm:$0xff]
    %v270 = vld [vmem:[#allocation4 + $0x490] sm:$0xff]
    %v271 = vld [vmem:[#allocation4 + $0x498] sm:$0xff]
    %v272 = vld [vmem:[#allocation4 + $0x4a0] sm:$0xff]
    %v273 = vld [vmem:[#allocation4 + $0x4a8] sm:$0xff]
    %v274 = vld [vmem:[#allocation4 + $0x4b0] sm:$0xff]
    %v275 = vld [vmem:[#allocation4 + $0x4b8] sm:$0xff]
    %v276 = vld [vmem:[#allocation4 + $0x4c0] sm:$0xff]
    %v277 = vld [vmem:[#allocation4 + $0x4c8] sm:$0xff]
    %v278 = vld [vmem:[#allocation4 + $0x4d0] sm:$0xff]
    %v279 = vld [vmem:[#allocation4 + $0x4d8] sm:$0xff]
    %v280 = vld [vmem:[#allocation4 + $0x4e0] sm:$0xff]
    %v281 = vld [vmem:[#allocation4 + $0x4e8] sm:$0xff]
    %v282 = vld [vmem:[#allocation4 + $0x4f0] sm:$0xff]
    %v283 = vld [vmem:[#allocation4 + $0x4f8] sm:$0xff]
    %v284 = vld [vmem:[#allocation4 + $0x500] sm:$0xff]
    %v285 = vld [vmem:[#allocation4 + $0x508] sm:$0xff]
    %v286 = vld [vmem:[#allocation4 + $0x510] sm:$0xff]
    %v287 = vld [vmem:[#allocation4 + $0x518] sm:$0xff]
    %v288 = vld [vmem:[#allocation4 + $0x520] sm:$0xff]
    %v289 = vld [vmem:[#allocation4 + $0x528] sm:$0xff]
    %v290 = vld [vmem:[#allocation4 + $0x530] sm:$0xff]
    %v291 = vld [vmem:[#allocation4 + $0x538] sm:$0xff]
    %v292 = vld [vmem:[#allocation4 + $0x540] sm:$0xff]
    %v293 = vld [vmem:[#allocation4 + $0x548] sm:$0xff]
    %v294 = vld [vmem:[#allocation4 + $0x550] sm:$0xff]
    %v295 = vld [vmem:[#allocation4 + $0x558] sm:$0xff]
    %v296 = vld [vmem:[#allocation4 + $0x560] sm:$0xff]
    %v297 = vld [vmem:[#allocation4 + $0x568] sm:$0xff]
    %v298 = vld [vmem:[#allocation4 + $0x570] sm:$0xff]
    %v299 = vld [vmem:[#allocation4 + $0x578] sm:$0xff]
    %v300 = vld [vmem:[#allocation4 + $0x580] sm:$0xff]
    %v301 = vld [vmem:[#allocation4 + $0x588] sm:$0xff]
    %v302 = vld [vmem:[#allocation4 + $0x590] sm:$0xff]
    %v303 = vld [vmem:[#allocation4 + $0x598] sm:$0xff]
    %v304 = vld [vmem:[#allocation4 + $0x5a0] sm:$0xff]
    %v305 = vld [vmem:[#allocation4 + $0x5a8] sm:$0xff]
    %v306 = vld [vmem:[#allocation4 + $0x5b0] sm:$0xff]
    %v307 = vld [vmem:[#allocation4 + $0x5b8] sm:$0xff]
    %v308 = vld [vmem:[#allocation4 + $0x5c0] sm:$0xff]
    %v309 = vld [vmem:[#allocation4 + $0x5c8] sm:$0xff]
    %v310 = vld [vmem:[#allocation4 + $0x5d0] sm:$0xff]
    %v311 = vld [vmem:[#allocation4 + $0x5d8] sm:$0xff]
    %v312 = vld [vmem:[#allocation4 + $0x5e0] sm:$0xff]
    %v313 = vld [vmem:[#allocation4 + $0x5e8] sm:$0xff]
    %v314 = vld [vmem:[#allocation4 + $0x5f0] sm:$0xff]
    %v315 = vld [vmem:[#allocation4 + $0x5f8] sm:$0xff]
    %v316 = vld [vmem:[#allocation4 + $0x600] sm:$0xff]
    %v317 = vld [vmem:[#allocation4 + $0x608] sm:$0xff]
    %v318 = vld [vmem:[#allocation4 + $0x610] sm:$0xff]
    %v319 = vld [vmem:[#allocation4 + $0x618] sm:$0xff]
    %v320 = vld [vmem:[%s2] sm:$0xf]
    %v322 = vlaneseq
    %v323 = vshrl.u32 %v322, 7
    %v324 = vsub.s32 0, %v323
    %v325 = vrot.slane %v320, %v324
    %v326 = vlaneseq
    %v327 = vshrl.u32 %v326, 7
    %v328 = vsub.s32 1, %v327
    %v329 = vrot.slane %v320, %v328
    %v330 = vlaneseq
    %v331 = vshrl.u32 %v330, 7
    %v332 = vsub.s32 2, %v331
    %v333 = vrot.slane %v320, %v332
    %v334 = vlaneseq
    %v335 = vshrl.u32 %v334, 7
    %v336 = vsub.s32 3, %v335
    %v337 = vrot.slane %v320, %v336
    %v538 = vunpack.c.l.b16 %v124
    %v539 = vunpack.c.h.b16 %v124
    %v540 = vunpack.c.l.b16 %v125
    %v541 = vunpack.c.h.b16 %v125
    %v542 = vunpack.c.l.b16 %v126
    %v543 = vunpack.c.h.b16 %v126
    %v544 = vunpack.c.l.b16 %v127
    %v545 = vunpack.c.h.b16 %v127
    %v546 = vunpack.c.l.b16 %v128
    %v547 = vunpack.c.h.b16 %v128
    %v548 = vunpack.c.l.b16 %v129
    %v549 = vunpack.c.h.b16 %v129
    %v550 = vunpack.c.l.b16 %v130
    %v551 = vunpack.c.h.b16 %v130
    %v552 = vunpack.c.l.b16 %v131
    %v553 = vunpack.c.h.b16 %v131
    %v554 = vunpack.c.l.b16 %v132
    %v555 = vunpack.c.h.b16 %v132
    %v556 = vunpack.c.l.b16 %v133
    %v557 = vunpack.c.h.b16 %v133
    %v558 = vunpack.c.l.b16 %v134
    %v559 = vunpack.c.h.b16 %v134
    %v560 = vunpack.c.l.b16 %v135
    %v561 = vunpack.c.h.b16 %v135
    %v562 = vunpack.c.l.b16 %v136
    %v563 = vunpack.c.h.b16 %v136
    %v564 = vunpack.c.l.b16 %v137
    %v565 = vunpack.c.h.b16 %v137
    %v566 = vunpack.c.l.b16 %v138
    %v567 = vunpack.c.h.b16 %v138
    %v568 = vunpack.c.l.b16 %v139
    %v569 = vunpack.c.h.b16 %v139
    %v570 = vunpack.c.l.b16 %v140
    %v571 = vunpack.c.h.b16 %v140
    %v572 = vunpack.c.l.b16 %v141
    %v573 = vunpack.c.h.b16 %v141
    %v574 = vunpack.c.l.b16 %v142
    %v575 = vunpack.c.h.b16 %v142
    %v576 = vunpack.c.l.b16 %v143
    %v577 = vunpack.c.h.b16 %v143
    %v578 = vunpack.c.l.b16 %v144
    %v579 = vunpack.c.h.b16 %v144
    %v580 = vunpack.c.l.b16 %v145
    %v581 = vunpack.c.h.b16 %v145
    %v582 = vunpack.c.l.b16 %v146
    %v583 = vunpack.c.h.b16 %v146
    %v584 = vunpack.c.l.b16 %v147
    %v585 = vunpack.c.h.b16 %v147
    %v586 = vunpack.c.l.b16 %v148
    %v587 = vunpack.c.h.b16 %v148
    %v588 = vunpack.c.l.b16 %v149
    %v589 = vunpack.c.h.b16 %v149
    %v590 = vunpack.c.l.b16 %v150
    %v591 = vunpack.c.h.b16 %v150
    %v592 = vunpack.c.l.b16 %v151
    %v593 = vunpack.c.h.b16 %v151
    %v594 = vunpack.c.l.b16 %v152
    %v595 = vunpack.c.h.b16 %v152
    %v596 = vunpack.c.l.b16 %v153
    %v597 = vunpack.c.h.b16 %v153
    %v598 = vunpack.c.l.b16 %v154
    %v599 = vunpack.c.h.b16 %v154
    %v600 = vunpack.c.l.b16 %v155
    %v601 = vunpack.c.h.b16 %v155
    %v602 = vunpack.c.l.b16 %v156
    %v603 = vunpack.c.h.b16 %v156
    %v604 = vunpack.c.l.b16 %v157
    %v605 = vunpack.c.h.b16 %v157
    %v606 = vunpack.c.l.b16 %v158
    %v607 = vunpack.c.h.b16 %v158
    %v608 = vunpack.c.l.b16 %v159
    %v609 = vunpack.c.h.b16 %v159
    %v610 = vunpack.c.l.b16 %v160
    %v611 = vunpack.c.h.b16 %v160
    %v612 = vunpack.c.l.b16 %v161
    %v613 = vunpack.c.h.b16 %v161
    %v614 = vunpack.c.l.b16 %v162
    %v615 = vunpack.c.h.b16 %v162
    %v616 = vunpack.c.l.b16 %v163
    %v617 = vunpack.c.h.b16 %v163
    %v618 = vunpack.c.l.b16 %v164
    %v619 = vunpack.c.h.b16 %v164
    %v620 = vunpack.c.l.b16 %v165
    %v621 = vunpack.c.h.b16 %v165
    %v622 = vunpack.c.l.b16 %v166
    %v623 = vunpack.c.h.b16 %v166
    %v624 = vunpack.c.l.b16 %v167
    %v625 = vunpack.c.h.b16 %v167
    %v626 = vunpack.c.l.b16 %v168
    %v627 = vunpack.c.h.b16 %v168
    %v628 = vunpack.c.l.b16 %v169
    %v629 = vunpack.c.h.b16 %v169
    %v630 = vunpack.c.l.b16 %v170
    %v631 = vunpack.c.h.b16 %v170
    %v632 = vunpack.c.l.b16 %v171
    %v633 = vunpack.c.h.b16 %v171
    %v634 = vunpack.c.l.b16 %v172
    %v635 = vunpack.c.h.b16 %v172
    %v636 = vunpack.c.l.b16 %v173
    %v637 = vunpack.c.h.b16 %v173
    %v638 = vunpack.c.l.b16 %v174
    %v639 = vunpack.c.h.b16 %v174
    %v640 = vunpack.c.l.b16 %v175
    %v641 = vunpack.c.h.b16 %v175
    %v642 = vunpack.c.l.b16 %v176
    %v643 = vunpack.c.h.b16 %v176
    %v644 = vunpack.c.l.b16 %v177
    %v645 = vunpack.c.h.b16 %v177
    %v646 = vunpack.c.l.b16 %v178
    %v647 = vunpack.c.h.b16 %v178
    %v648 = vunpack.c.l.b16 %v179
    %v649 = vunpack.c.h.b16 %v179
    %v650 = vunpack.c.l.b16 %v180
    %v651 = vunpack.c.h.b16 %v180
    %v652 = vunpack.c.l.b16 %v181
    %v653 = vunpack.c.h.b16 %v181
    %v654 = vunpack.c.l.b16 %v182
    %v655 = vunpack.c.h.b16 %v182
    %v656 = vunpack.c.l.b16 %v183
    %v657 = vunpack.c.h.b16 %v183
    %v658 = vunpack.c.l.b16 %v184
    %v659 = vunpack.c.h.b16 %v184
    %v660 = vunpack.c.l.b16 %v185
    %v661 = vunpack.c.h.b16 %v185
    %v662 = vunpack.c.l.b16 %v186
    %v663 = vunpack.c.h.b16 %v186
    %v664 = vunpack.c.l.b16 %v187
    %v665 = vunpack.c.h.b16 %v187
    %v666 = vunpack.c.l.b16 %v188
    %v667 = vunpack.c.h.b16 %v188
    %v668 = vunpack.c.l.b16 %v189
    %v669 = vunpack.c.h.b16 %v189
    %v670 = vunpack.c.l.b16 %v190
    %v671 = vunpack.c.h.b16 %v190
    %v672 = vunpack.c.l.b16 %v191
    %v673 = vunpack.c.h.b16 %v191
    %v674 = vunpack.c.l.b16 %v192
    %v675 = vunpack.c.h.b16 %v192
    %v676 = vunpack.c.l.b16 %v193
    %v677 = vunpack.c.h.b16 %v193
    %v678 = vunpack.c.l.b16 %v194
    %v679 = vunpack.c.h.b16 %v194
    %v680 = vunpack.c.l.b16 %v195
    %v681 = vunpack.c.h.b16 %v195
    %v682 = vunpack.c.l.b16 %v196
    %v683 = vunpack.c.h.b16 %v196
    %v684 = vunpack.c.l.b16 %v197
    %v685 = vunpack.c.h.b16 %v197
    %v686 = vunpack.c.l.b16 %v198
    %v687 = vunpack.c.h.b16 %v198
    %v688 = vunpack.c.l.b16 %v199
    %v689 = vunpack.c.h.b16 %v199
    %v690 = vunpack.c.l.b16 %v200
    %v691 = vunpack.c.h.b16 %v200
    %v692 = vunpack.c.l.b16 %v201
    %v693 = vunpack.c.h.b16 %v201
    %v694 = vunpack.c.l.b16 %v202
    %v695 = vunpack.c.h.b16 %v202
    %v696 = vunpack.c.l.b16 %v203
    %v697 = vunpack.c.h.b16 %v203
    %v698 = vunpack.c.l.b16 %v204
    %v699 = vunpack.c.h.b16 %v204
    %v700 = vunpack.c.l.b16 %v205
    %v701 = vunpack.c.h.b16 %v205
    %v702 = vunpack.c.l.b16 %v206
    %v703 = vunpack.c.h.b16 %v206
    %v704 = vunpack.c.l.b16 %v207
    %v705 = vunpack.c.h.b16 %v207
    %v706 = vunpack.c.l.b16 %v208
    %v707 = vunpack.c.h.b16 %v208
    %v708 = vunpack.c.l.b16 %v209
    %v709 = vunpack.c.h.b16 %v209
    %v710 = vunpack.c.l.b16 %v210
    %v711 = vunpack.c.h.b16 %v210
    %v712 = vunpack.c.l.b16 %v211
    %v713 = vunpack.c.h.b16 %v211
    %v714 = vunpack.c.l.b16 %v212
    %v715 = vunpack.c.h.b16 %v212
    %v716 = vunpack.c.l.b16 %v213
    %v717 = vunpack.c.h.b16 %v213
    %v718 = vunpack.c.l.b16 %v214
    %v719 = vunpack.c.h.b16 %v214
    %v720 = vunpack.c.l.b16 %v215
    %v721 = vunpack.c.h.b16 %v215
    %v722 = vunpack.c.l.b16 %v216
    %v723 = vunpack.c.h.b16 %v216
    %v724 = vunpack.c.l.b16 %v217
    %v725 = vunpack.c.h.b16 %v217
    %v726 = vunpack.c.l.b16 %v218
    %v727 = vunpack.c.h.b16 %v218
    %v728 = vunpack.c.l.b16 %v219
    %v729 = vunpack.c.h.b16 %v219
    %v730 = vunpack.c.l.b16 %v220
    %v731 = vunpack.c.h.b16 %v220
    %v732 = vunpack.c.l.b16 %v221
    %v733 = vunpack.c.h.b16 %v221
    %v734 = vunpack.c.l.b16 %v222
    %v735 = vunpack.c.h.b16 %v222
    %v736 = vunpack.c.l.b16 %v223
    %v737 = vunpack.c.h.b16 %v223
    %v738 = vunpack.c.l.b16 %v224
    %v739 = vunpack.c.h.b16 %v224
    %v740 = vunpack.c.l.b16 %v225
    %v741 = vunpack.c.h.b16 %v225
    %v742 = vunpack.c.l.b16 %v226
    %v743 = vunpack.c.h.b16 %v226
    %v744 = vunpack.c.l.b16 %v227
    %v745 = vunpack.c.h.b16 %v227
    %v746 = vunpack.c.l.b16 %v228
    %v747 = vunpack.c.h.b16 %v228
    %v748 = vunpack.c.l.b16 %v229
    %v749 = vunpack.c.h.b16 %v229
    %v750 = vunpack.c.l.b16 %v230
    %v751 = vunpack.c.h.b16 %v230
    %v752 = vunpack.c.l.b16 %v231
    %v753 = vunpack.c.h.b16 %v231
    %v754 = vunpack.c.l.b16 %v232
    %v755 = vunpack.c.h.b16 %v232
    %v756 = vunpack.c.l.b16 %v233
    %v757 = vunpack.c.h.b16 %v233
    %v758 = vunpack.c.l.b16 %v234
    %v759 = vunpack.c.h.b16 %v234
    %v760 = vunpack.c.l.b16 %v235
    %v761 = vunpack.c.h.b16 %v235
    %v762 = vunpack.c.l.b16 %v236
    %v763 = vunpack.c.h.b16 %v236
    %v764 = vunpack.c.l.b16 %v237
    %v765 = vunpack.c.h.b16 %v237
    %v766 = vunpack.c.l.b16 %v238
    %v767 = vunpack.c.h.b16 %v238
    %v768 = vunpack.c.l.b16 %v239
    %v769 = vunpack.c.h.b16 %v239
    %v770 = vunpack.c.l.b16 %v240
    %v771 = vunpack.c.h.b16 %v240
    %v772 = vunpack.c.l.b16 %v241
    %v773 = vunpack.c.h.b16 %v241
    %v774 = vunpack.c.l.b16 %v242
    %v775 = vunpack.c.h.b16 %v242
    %v776 = vunpack.c.l.b16 %v243
    %v777 = vunpack.c.h.b16 %v243
    %v778 = vunpack.c.l.b16 %v244
    %v779 = vunpack.c.h.b16 %v244
    %v780 = vunpack.c.l.b16 %v245
    %v781 = vunpack.c.h.b16 %v245
    %v782 = vunpack.c.l.b16 %v246
    %v783 = vunpack.c.h.b16 %v246
    %v784 = vunpack.c.l.b16 %v247
    %v785 = vunpack.c.h.b16 %v247
    %v786 = vunpack.c.l.b16 %v248
    %v787 = vunpack.c.h.b16 %v248
    %v788 = vunpack.c.l.b16 %v249
    %v789 = vunpack.c.h.b16 %v249
    %v790 = vunpack.c.l.b16 %v250
    %v791 = vunpack.c.h.b16 %v250
    %v792 = vunpack.c.l.b16 %v251
    %v793 = vunpack.c.h.b16 %v251
    %v794 = vunpack.c.l.b16 %v252
    %v795 = vunpack.c.h.b16 %v252
    %v796 = vunpack.c.l.b16 %v253
    %v797 = vunpack.c.h.b16 %v253
    %v798 = vunpack.c.l.b16 %v254
    %v799 = vunpack.c.h.b16 %v254
    %v800 = vunpack.c.l.b16 %v255
    %v801 = vunpack.c.h.b16 %v255
    %v802 = vunpack.c.l.b16 %v256
    %v803 = vunpack.c.h.b16 %v256
    %v804 = vunpack.c.l.b16 %v257
    %v805 = vunpack.c.h.b16 %v257
    %v806 = vunpack.c.l.b16 %v258
    %v807 = vunpack.c.h.b16 %v258
    %v808 = vunpack.c.l.b16 %v259
    %v809 = vunpack.c.h.b16 %v259
    %v810 = vunpack.c.l.b16 %v260
    %v811 = vunpack.c.h.b16 %v260
    %v812 = vunpack.c.l.b16 %v261
    %v813 = vunpack.c.h.b16 %v261
    %v814 = vunpack.c.l.b16 %v262
    %v815 = vunpack.c.h.b16 %v262
    %v816 = vunpack.c.l.b16 %v263
    %v817 = vunpack.c.h.b16 %v263
    %v818 = vunpack.c.l.b16 %v264
    %v819 = vunpack.c.h.b16 %v264
    %v820 = vunpack.c.l.b16 %v265
    %v821 = vunpack.c.h.b16 %v265
    %v822 = vunpack.c.l.b16 %v266
    %v823 = vunpack.c.h.b16 %v266
    %v824 = vunpack.c.l.b16 %v267
    %v825 = vunpack.c.h.b16 %v267
    %v826 = vunpack.c.l.b16 %v268
    %v827 = vunpack.c.h.b16 %v268
    %v828 = vunpack.c.l.b16 %v269
    %v829 = vunpack.c.h.b16 %v269
    %v830 = vunpack.c.l.b16 %v270
    %v831 = vunpack.c.h.b16 %v270
    %v832 = vunpack.c.l.b16 %v271
    %v833 = vunpack.c.h.b16 %v271
    %v834 = vunpack.c.l.b16 %v272
    %v835 = vunpack.c.h.b16 %v272
    %v836 = vunpack.c.l.b16 %v273
    %v837 = vunpack.c.h.b16 %v273
    %v838 = vunpack.c.l.b16 %v274
    %v839 = vunpack.c.h.b16 %v274
    %v840 = vunpack.c.l.b16 %v275
    %v841 = vunpack.c.h.b16 %v275
    %v842 = vunpack.c.l.b16 %v276
    %v843 = vunpack.c.h.b16 %v276
    %v844 = vunpack.c.l.b16 %v277
    %v845 = vunpack.c.h.b16 %v277
    %v846 = vunpack.c.l.b16 %v278
    %v847 = vunpack.c.h.b16 %v278
    %v848 = vunpack.c.l.b16 %v279
    %v849 = vunpack.c.h.b16 %v279
    %v850 = vunpack.c.l.b16 %v280
    %v851 = vunpack.c.h.b16 %v280
    %v852 = vunpack.c.l.b16 %v281
    %v853 = vunpack.c.h.b16 %v281
    %v854 = vunpack.c.l.b16 %v282
    %v855 = vunpack.c.h.b16 %v282
    %v856 = vunpack.c.l.b16 %v283
    %v857 = vunpack.c.h.b16 %v283
    %v858 = vunpack.c.l.b16 %v284
    %v859 = vunpack.c.h.b16 %v284
    %v860 = vunpack.c.l.b16 %v285
    %v861 = vunpack.c.h.b16 %v285
    %v862 = vunpack.c.l.b16 %v286
    %v863 = vunpack.c.h.b16 %v286
    %v864 = vunpack.c.l.b16 %v287
    %v865 = vunpack.c.h.b16 %v287
    %v866 = vunpack.c.l.b16 %v288
    %v867 = vunpack.c.h.b16 %v288
    %v868 = vunpack.c.l.b16 %v289
    %v869 = vunpack.c.h.b16 %v289
    %v870 = vunpack.c.l.b16 %v290
    %v871 = vunpack.c.h.b16 %v290
    %v872 = vunpack.c.l.b16 %v291
    %v873 = vunpack.c.h.b16 %v291
    %v874 = vunpack.c.l.b16 %v292
    %v875 = vunpack.c.h.b16 %v292
    %v876 = vunpack.c.l.b16 %v293
    %v877 = vunpack.c.h.b16 %v293
    %v878 = vunpack.c.l.b16 %v294
    %v879 = vunpack.c.h.b16 %v294
    %v880 = vunpack.c.l.b16 %v295
    %v881 = vunpack.c.h.b16 %v295
    %v882 = vunpack.c.l.b16 %v296
    %v883 = vunpack.c.h.b16 %v296
    %v884 = vunpack.c.l.b16 %v297
    %v885 = vunpack.c.h.b16 %v297
    %v886 = vunpack.c.l.b16 %v298
    %v887 = vunpack.c.h.b16 %v298
    %v888 = vunpack.c.l.b16 %v299
    %v889 = vunpack.c.h.b16 %v299
    %v890 = vunpack.c.l.b16 %v300
    %v891 = vunpack.c.h.b16 %v300
    %v892 = vunpack.c.l.b16 %v301
    %v893 = vunpack.c.h.b16 %v301
    %v894 = vunpack.c.l.b16 %v302
    %v895 = vunpack.c.h.b16 %v302
    %v896 = vunpack.c.l.b16 %v303
    %v897 = vunpack.c.h.b16 %v303
    %v898 = vunpack.c.l.b16 %v304
    %v899 = vunpack.c.h.b16 %v304
    %v900 = vunpack.c.l.b16 %v305
    %v901 = vunpack.c.h.b16 %v305
    %v902 = vunpack.c.l.b16 %v306
    %v903 = vunpack.c.h.b16 %v306
    %v904 = vunpack.c.l.b16 %v307
    %v905 = vunpack.c.h.b16 %v307
    %v906 = vunpack.c.l.b16 %v308
    %v907 = vunpack.c.h.b16 %v308
    %v908 = vunpack.c.l.b16 %v309
    %v909 = vunpack.c.h.b16 %v309
    %v910 = vunpack.c.l.b16 %v310
    %v911 = vunpack.c.h.b16 %v310
    %v912 = vunpack.c.l.b16 %v311
    %v913 = vunpack.c.h.b16 %v311
    %v914 = vunpack.c.l.b16 %v312
    %v915 = vunpack.c.h.b16 %v312
    %v916 = vunpack.c.l.b16 %v313
    %v917 = vunpack.c.h.b16 %v313
    %v918 = vunpack.c.l.b16 %v314
    %v919 = vunpack.c.h.b16 %v314
    %v920 = vunpack.c.l.b16 %v315
    %v921 = vunpack.c.h.b16 %v315
    %v922 = vunpack.c.l.b16 %v316
    %v923 = vunpack.c.h.b16 %v316
    %v924 = vunpack.c.l.b16 %v317
    %v925 = vunpack.c.h.b16 %v317
    %v926 = vunpack.c.l.b16 %v318
    %v927 = vunpack.c.h.b16 %v318
    %v928 = vunpack.c.l.b16 %v319
    %v929 = vunpack.c.h.b16 %v319
    %v930 = vpack.c.b16 %v542, %v538
    %v931 = vpack.c.b16 %v543, %v539
    %v932 = vpack.c.b16 %v544, %v540
    %v933 = vpack.c.b16 %v545, %v541
    %v934 = vpack.c.b16 %v550, %v546
    %v935 = vpack.c.b16 %v551, %v547
    %v936 = vpack.c.b16 %v552, %v548
    %v937 = vpack.c.b16 %v553, %v549
    %v938 = vpack.c.b16 %v558, %v554
    %v939 = vpack.c.b16 %v559, %v555
    %v940 = vpack.c.b16 %v560, %v556
    %v941 = vpack.c.b16 %v561, %v557
    %v942 = vpack.c.b16 %v566, %v562
    %v943 = vpack.c.b16 %v567, %v563
    %v944 = vpack.c.b16 %v568, %v564
    %v945 = vpack.c.b16 %v569, %v565
    %v946 = vpack.c.b16 %v574, %v570
    %v947 = vpack.c.b16 %v575, %v571
    %v948 = vpack.c.b16 %v576, %v572
    %v949 = vpack.c.b16 %v577, %v573
    %v950 = vpack.c.b16 %v582, %v578
    %v951 = vpack.c.b16 %v583, %v579
    %v952 = vpack.c.b16 %v584, %v580
    %v953 = vpack.c.b16 %v585, %v581
    %v954 = vpack.c.b16 %v590, %v586
    %v955 = vpack.c.b16 %v591, %v587
    %v956 = vpack.c.b16 %v592, %v588
    %v957 = vpack.c.b16 %v593, %v589
    %v958 = vpack.c.b16 %v598, %v594
    %v959 = vpack.c.b16 %v599, %v595
    %v960 = vpack.c.b16 %v600, %v596
    %v961 = vpack.c.b16 %v601, %v597
    %v962 = vpack.c.b16 %v606, %v602
    %v963 = vpack.c.b16 %v607, %v603
    %v964 = vpack.c.b16 %v608, %v604
    %v965 = vpack.c.b16 %v609, %v605
    %v966 = vpack.c.b16 %v614, %v610
    %v967 = vpack.c.b16 %v615, %v611
    %v968 = vpack.c.b16 %v616, %v612
    %v969 = vpack.c.b16 %v617, %v613
    %v970 = vpack.c.b16 %v622, %v618
    %v971 = vpack.c.b16 %v623, %v619
    %v972 = vpack.c.b16 %v624, %v620
    %v973 = vpack.c.b16 %v625, %v621
    %v974 = vpack.c.b16 %v630, %v626
    %v975 = vpack.c.b16 %v631, %v627
    %v976 = vpack.c.b16 %v632, %v628
    %v977 = vpack.c.b16 %v633, %v629
    %v978 = vpack.c.b16 %v638, %v634
    %v979 = vpack.c.b16 %v639, %v635
    %v980 = vpack.c.b16 %v640, %v636
    %v981 = vpack.c.b16 %v641, %v637
    %v982 = vpack.c.b16 %v646, %v642
    %v983 = vpack.c.b16 %v647, %v643
    %v984 = vpack.c.b16 %v648, %v644
    %v985 = vpack.c.b16 %v649, %v645
    %v986 = vpack.c.b16 %v654, %v650
    %v987 = vpack.c.b16 %v655, %v651
    %v988 = vpack.c.b16 %v656, %v652
    %v989 = vpack.c.b16 %v657, %v653
    %v990 = vpack.c.b16 %v662, %v658
    %v991 = vpack.c.b16 %v663, %v659
    %v992 = vpack.c.b16 %v664, %v660
    %v993 = vpack.c.b16 %v665, %v661
    %v994 = vpack.c.b16 %v670, %v666
    %v995 = vpack.c.b16 %v671, %v667
    %v996 = vpack.c.b16 %v672, %v668
    %v997 = vpack.c.b16 %v673, %v669
    %v998 = vpack.c.b16 %v678, %v674
    %v999 = vpack.c.b16 %v679, %v675
    %v1000 = vpack.c.b16 %v680, %v676
    %v1001 = vpack.c.b16 %v681, %v677
    %v1002 = vpack.c.b16 %v686, %v682
    %v1003 = vpack.c.b16 %v687, %v683
    %v1004 = vpack.c.b16 %v688, %v684
    %v1005 = vpack.c.b16 %v689, %v685
    %v1006 = vpack.c.b16 %v694, %v690
    %v1007 = vpack.c.b16 %v695, %v691
    %v1008 = vpack.c.b16 %v696, %v692
    %v1009 = vpack.c.b16 %v697, %v693
    %v1010 = vpack.c.b16 %v702, %v698
    %v1011 = vpack.c.b16 %v703, %v699
    %v1012 = vpack.c.b16 %v704, %v700
    %v1013 = vpack.c.b16 %v705, %v701
    %v1014 = vpack.c.b16 %v710, %v706
    %v1015 = vpack.c.b16 %v711, %v707
    %v1016 = vpack.c.b16 %v712, %v708
    %v1017 = vpack.c.b16 %v713, %v709
    %v1018 = vpack.c.b16 %v718, %v714
    %v1019 = vpack.c.b16 %v719, %v715
    %v1020 = vpack.c.b16 %v720, %v716
    %v1021 = vpack.c.b16 %v721, %v717
    %v1022 = vpack.c.b16 %v726, %v722
    %v1023 = vpack.c.b16 %v727, %v723
    %v1024 = vpack.c.b16 %v728, %v724
    %v1025 = vpack.c.b16 %v729, %v725
    %v1026 = vpack.c.b16 %v734, %v730
    %v1027 = vpack.c.b16 %v735, %v731
    %v1028 = vpack.c.b16 %v736, %v732
    %v1029 = vpack.c.b16 %v737, %v733
    %v1030 = vpack.c.b16 %v742, %v738
    %v1031 = vpack.c.b16 %v743, %v739
    %v1032 = vpack.c.b16 %v744, %v740
    %v1033 = vpack.c.b16 %v745, %v741
    %v1034 = vpack.c.b16 %v750, %v746
    %v1035 = vpack.c.b16 %v751, %v747
    %v1036 = vpack.c.b16 %v752, %v748
    %v1037 = vpack.c.b16 %v753, %v749
    %v1038 = vpack.c.b16 %v758, %v754
    %v1039 = vpack.c.b16 %v759, %v755
    %v1040 = vpack.c.b16 %v760, %v756
    %v1041 = vpack.c.b16 %v761, %v757
    %v1042 = vpack.c.b16 %v766, %v762
    %v1043 = vpack.c.b16 %v767, %v763
    %v1044 = vpack.c.b16 %v768, %v764
    %v1045 = vpack.c.b16 %v769, %v765
    %v1046 = vpack.c.b16 %v774, %v770
    %v1047 = vpack.c.b16 %v775, %v771
    %v1048 = vpack.c.b16 %v776, %v772
    %v1049 = vpack.c.b16 %v777, %v773
    %v1050 = vpack.c.b16 %v782, %v778
    %v1051 = vpack.c.b16 %v783, %v779
    %v1052 = vpack.c.b16 %v784, %v780
    %v1053 = vpack.c.b16 %v785, %v781
    %v1054 = vpack.c.b16 %v790, %v786
    %v1055 = vpack.c.b16 %v791, %v787
    %v1056 = vpack.c.b16 %v792, %v788
    %v1057 = vpack.c.b16 %v793, %v789
    %v1058 = vpack.c.b16 %v798, %v794
    %v1059 = vpack.c.b16 %v799, %v795
    %v1060 = vpack.c.b16 %v800, %v796
    %v1061 = vpack.c.b16 %v801, %v797
    %v1062 = vpack.c.b16 %v806, %v802
    %v1063 = vpack.c.b16 %v807, %v803
    %v1064 = vpack.c.b16 %v808, %v804
    %v1065 = vpack.c.b16 %v809, %v805
    %v1066 = vpack.c.b16 %v814, %v810
    %v1067 = vpack.c.b16 %v815, %v811
    %v1068 = vpack.c.b16 %v816, %v812
    %v1069 = vpack.c.b16 %v817, %v813
    %v1070 = vpack.c.b16 %v822, %v818
    %v1071 = vpack.c.b16 %v823, %v819
    %v1072 = vpack.c.b16 %v824, %v820
    %v1073 = vpack.c.b16 %v825, %v821
    %v1074 = vpack.c.b16 %v830, %v826
    %v1075 = vpack.c.b16 %v831, %v827
    %v1076 = vpack.c.b16 %v832, %v828
    %v1077 = vpack.c.b16 %v833, %v829
    %v1078 = vpack.c.b16 %v838, %v834
    %v1079 = vpack.c.b16 %v839, %v835
    %v1080 = vpack.c.b16 %v840, %v836
    %v1081 = vpack.c.b16 %v841, %v837
    %v1082 = vpack.c.b16 %v846, %v842
    %v1083 = vpack.c.b16 %v847, %v843
    %v1084 = vpack.c.b16 %v848, %v844
    %v1085 = vpack.c.b16 %v849, %v845
    %v1086 = vpack.c.b16 %v854, %v850
    %v1087 = vpack.c.b16 %v855, %v851
    %v1088 = vpack.c.b16 %v856, %v852
    %v1089 = vpack.c.b16 %v857, %v853
    %v1090 = vpack.c.b16 %v862, %v858
    %v1091 = vpack.c.b16 %v863, %v859
    %v1092 = vpack.c.b16 %v864, %v860
    %v1093 = vpack.c.b16 %v865, %v861
    %v1094 = vpack.c.b16 %v870, %v866
    %v1095 = vpack.c.b16 %v871, %v867
    %v1096 = vpack.c.b16 %v872, %v868
    %v1097 = vpack.c.b16 %v873, %v869
    %v1098 = vpack.c.b16 %v878, %v874
    %v1099 = vpack.c.b16 %v879, %v875
    %v1100 = vpack.c.b16 %v880, %v876
    %v1101 = vpack.c.b16 %v881, %v877
    %v1102 = vpack.c.b16 %v886, %v882
    %v1103 = vpack.c.b16 %v887, %v883
    %v1104 = vpack.c.b16 %v888, %v884
    %v1105 = vpack.c.b16 %v889, %v885
    %v1106 = vpack.c.b16 %v894, %v890
    %v1107 = vpack.c.b16 %v895, %v891
    %v1108 = vpack.c.b16 %v896, %v892
    %v1109 = vpack.c.b16 %v897, %v893
    %v1110 = vpack.c.b16 %v902, %v898
    %v1111 = vpack.c.b16 %v903, %v899
    %v1112 = vpack.c.b16 %v904, %v900
    %v1113 = vpack.c.b16 %v905, %v901
    %v1114 = vpack.c.b16 %v910, %v906
    %v1115 = vpack.c.b16 %v911, %v907
    %v1116 = vpack.c.b16 %v912, %v908
    %v1117 = vpack.c.b16 %v913, %v909
    %v1118 = vpack.c.b16 %v918, %v914
    %v1119 = vpack.c.b16 %v919, %v915
    %v1120 = vpack.c.b16 %v920, %v916
    %v1121 = vpack.c.b16 %v921, %v917
    %v1122 = vpack.c.b16 %v926, %v922
    %v1123 = vpack.c.b16 %v927, %v923
    %v1124 = vpack.c.b16 %v928, %v924
    %v1125 = vpack.c.b16 %v929, %v925
    %vm1322 = vcmask 130048
    %v1324 = vsel %vm1322, %v116, 0
    %v1327 = vsel %vm1322, %v123, 0
    %1329 = vmatprep.subr.bf16.mxu0 %v931
    %1330 = vmatpush1.bf16.msra.mxu0 %v930
    %1331 = vmatprep.subr.bf16.mxu0 %v935
    %1332 = vmatpush1.bf16.msra.mxu0 %v934
    %1333 = vmatprep.subr.bf16.mxu0 %v939
    %1334 = vmatpush1.bf16.msra.mxu0 %v938
    %1335 = vmatprep.subr.bf16.mxu0 %v943
    %1336 = vmatpush1.bf16.msra.mxu0 %v942
    %1337 = vmatprep.subr.bf16.mxu0 %v947
    %1338 = vmatpush1.bf16.msra.mxu0 %v946
    %1339 = vmatprep.subr.bf16.mxu0 %v951
    %1340 = vmatpush1.bf16.msra.mxu0 %v950
    %1341 = vmatprep.subr.bf16.mxu0 %v955
    %1342 = vmatpush1.bf16.msra.mxu0 %v954
    %1343 = vmatprep.subr.bf16.mxu0 %v959
    %1344 = vmatpush1.bf16.msra.mxu0 %v958
    %1345 = vmatprep.subr.bf16.mxu0 %v963
    %1346 = vmatpush1.bf16.msra.mxu0 %v962
    %1347 = vmatprep.subr.bf16.mxu0 %v967
    %1348 = vmatpush1.bf16.msra.mxu0 %v966
    %1349 = vmatprep.subr.bf16.mxu0 %v971
    %1350 = vmatpush1.bf16.msra.mxu0 %v970
    %1351 = vmatprep.subr.bf16.mxu0 %v975
    %1352 = vmatpush1.bf16.msra.mxu0 %v974
    %1353 = vmatprep.subr.bf16.mxu0 %v979
    %1354 = vmatpush1.bf16.msra.mxu0 %v978
    %1355 = vmatprep.subr.bf16.mxu0 %v983
    %1356 = vmatpush1.bf16.msra.mxu0 %v982
    %1357 = vmatprep.subr.bf16.mxu0 %v987
    %1358 = vmatpush1.bf16.msra.mxu0 %v986
    %1359 = vmatprep.subr.bf16.mxu0 %v991
    %1360 = vmatpush1.bf16.msra.mxu0 %v990
    %1361 = vmatprep.mubr.bf16.mxu0 %v111
    %1362 = vmatmul.mubr.bf16.gmra.mrb[0].mxu0 %v110
    %v1363 = vpop.f32.mrb[0].mxu0
    %v1364 = vadd.f32 %v325, %v1363
    %v1365 = vpop.f32.mrb[0].mxu0
    %v1366 = vadd.f32 %v329, %v1365
    %v1367 = vpop.f32.mrb[0].mxu0
    %v1368 = vadd.f32 %v325, %v1367
    %v1369 = vpop.f32.mrb[0].mxu0
    %v1370 = vadd.f32 %v329, %v1369
    %1371 = vmatprep.mubr.bf16.mxu0 %v118
    %1372 = vmatmul.mubr.bf16.gmra.mrb[0].mxu0 %v117
    %v1373 = vpop.f32.mrb[0].mxu0
    %v1374 = vadd.f32 %v325, %v1373
    %v1375 = vpop.f32.mrb[0].mxu0
    %v1376 = vadd.f32 %v329, %v1375
    %v1377 = vpop.f32.mrb[0].mxu0
    %v1378 = vadd.f32 %v325, %v1377
    %v1379 = vpop.f32.mrb[0].mxu0
    %v1380 = vadd.f32 %v329, %v1379
    %1381 = vdwg.mxu0
    %1382 = vmatprep.subr.bf16.mxu0 %v995
    %1383 = vmatpush1.bf16.msra.mxu0 %v994
    %1384 = vmatprep.subr.bf16.mxu0 %v999
    %1385 = vmatpush1.bf16.msra.mxu0 %v998
    %1386 = vmatprep.subr.bf16.mxu0 %v1003
    %1387 = vmatpush1.bf16.msra.mxu0 %v1002
    %1388 = vmatprep.subr.bf16.mxu0 %v1007
    %1389 = vmatpush1.bf16.msra.mxu0 %v1006
    %1390 = vmatprep.subr.bf16.mxu0 %v1011
    %1391 = vmatpush1.bf16.msra.mxu0 %v1010
    %1392 = vmatprep.subr.bf16.mxu0 %v1015
    %1393 = vmatpush1.bf16.msra.mxu0 %v1014
    %1394 = vmatprep.subr.bf16.mxu0 %v1019
    %1395 = vmatpush1.bf16.msra.mxu0 %v1018
    %1396 = vmatprep.subr.bf16.mxu0 %v1023
    %1397 = vmatpush1.bf16.msra.mxu0 %v1022
    %1398 = vmatprep.subr.bf16.mxu0 %v1027
    %1399 = vmatpush1.bf16.msra.mxu0 %v1026
    %1400 = vmatprep.subr.bf16.mxu0 %v1031
    %1401 = vmatpush1.bf16.msra.mxu0 %v1030
    %1402 = vmatprep.subr.bf16.mxu0 %v1035
    %1403 = vmatpush1.bf16.msra.mxu0 %v1034
    %1404 = vmatprep.subr.bf16.mxu0 %v1039
    %1405 = vmatpush1.bf16.msra.mxu0 %v1038
    %1406 = vmatprep.subr.bf16.mxu0 %v1043
    %1407 = vmatpush1.bf16.msra.mxu0 %v1042
    %1408 = vmatprep.subr.bf16.mxu0 %v1047
    %1409 = vmatpush1.bf16.msra.mxu0 %v1046
    %1410 = vmatprep.subr.bf16.mxu0 %v1051
    %1411 = vmatpush1.bf16.msra.mxu0 %v1050
    %1412 = vmatprep.subr.bf16.mxu0 %v1055
    %1413 = vmatpush1.bf16.msra.mxu0 %v1054
    %1414 = vmatprep.mubr.bf16.mxu0 %v113
    %1415 = vmatmul.mubr.bf16.gmra.mrb[0].mxu0 %v112
    %v1416 = vpop.f32.mrb[0].mxu0
    %v1417 = vadd.f32 %v1364, %v1416
    %v1418 = vpop.f32.mrb[0].mxu0
    %v1419 = vadd.f32 %v1366, %v1418
    %v1420 = vpop.f32.mrb[0].mxu0
    %v1421 = vadd.f32 %v1368, %v1420
    %v1422 = vpop.f32.mrb[0].mxu0
    %v1423 = vadd.f32 %v1370, %v1422
    %1424 = vmatprep.mubr.bf16.mxu0 %v120
    %1425 = vmatmul.mubr.bf16.gmra.mrb[0].mxu0 %v119
    %v1426 = vpop.f32.mrb[0].mxu0
    %v1427 = vadd.f32 %v1374, %v1426
    %v1428 = vpop.f32.mrb[0].mxu0
    %v1429 = vadd.f32 %v1376, %v1428
    %v1430 = vpop.f32.mrb[0].mxu0
    %v1431 = vadd.f32 %v1378, %v1430
    %v1432 = vpop.f32.mrb[0].mxu0
    %v1433 = vadd.f32 %v1380, %v1432
    %1434 = vdwg.mxu0
    %1435 = vmatprep.subr.bf16.mxu0 %v1059
    %1436 = vmatpush1.bf16.msra.mxu0 %v1058
    %1437 = vmatprep.subr.bf16.mxu0 %v1063
    %1438 = vmatpush1.bf16.msra.mxu0 %v1062
    %1439 = vmatprep.subr.bf16.mxu0 %v1067
    %1440 = vmatpush1.bf16.msra.mxu0 %v1066
    %1441 = vmatprep.subr.bf16.mxu0 %v1071
    %1442 = vmatpush1.bf16.msra.mxu0 %v1070
    %1443 = vmatprep.subr.bf16.mxu0 %v1075
    %1444 = vmatpush1.bf16.msra.mxu0 %v1074
    %1445 = vmatprep.subr.bf16.mxu0 %v1079
    %1446 = vmatpush1.bf16.msra.mxu0 %v1078
    %1447 = vmatprep.subr.bf16.mxu0 %v1083
    %1448 = vmatpush1.bf16.msra.mxu0 %v1082
    %1449 = vmatprep.subr.bf16.mxu0 %v1087
    %1450 = vmatpush1.bf16.msra.mxu0 %v1086
    %1451 = vmatprep.subr.bf16.mxu0 %v1091
    %1452 = vmatpush1.bf16.msra.mxu0 %v1090
    %1453 = vmatprep.subr.bf16.mxu0 %v1095
    %1454 = vmatpush1.bf16.msra.mxu0 %v1094
    %1455 = vmatprep.subr.bf16.mxu0 %v1099
    %1456 = vmatpush1.bf16.msra.mxu0 %v1098
    %1457 = vmatprep.subr.bf16.mxu0 %v1103
    %1458 = vmatpush1.bf16.msra.mxu0 %v1102
    %1459 = vmatprep.subr.bf16.mxu0 %v1107
    %1460 = vmatpush1.bf16.msra.mxu0 %v1106
    %1461 = vmatprep.subr.bf16.mxu0 %v1111
    %1462 = vmatpush1.bf16.msra.mxu0 %v1110
    %1463 = vmatprep.subr.bf16.mxu0 %v1115
    %1464 = vmatpush1.bf16.msra.mxu0 %v1114
    %1465 = vmatprep.subr.bf16.mxu0 %v1119
    %1466 = vmatpush1.bf16.msra.mxu0 %v1118
    %1467 = vmatprep.mubr.bf16.mxu0 %v115
    %1468 = vmatmul.mubr.bf16.gmra.mrb[0].mxu0 %v114
    %v1469 = vpop.f32.mrb[0].mxu0
    %v1470 = vadd.f32 %v1417, %v1469
    %v1471 = vpop.f32.mrb[0].mxu0
    %v1472 = vadd.f32 %v1419, %v1471
    %v1473 = vpop.f32.mrb[0].mxu0
    %v1474 = vadd.f32 %v1421, %v1473
    %v1475 = vpop.f32.mrb[0].mxu0
    %v1476 = vadd.f32 %v1423, %v1475
    %1477 = vmatprep.mubr.bf16.mxu0 %v122
    %1478 = vmatmul.mubr.bf16.gmra.mrb[0].mxu0 %v121
    %v1479 = vpop.f32.mrb[0].mxu0
    %v1480 = vadd.f32 %v1427, %v1479
    %v1481 = vpop.f32.mrb[0].mxu0
    %v1482 = vadd.f32 %v1429, %v1481
    %v1483 = vpop.f32.mrb[0].mxu0
    %v1484 = vadd.f32 %v1431, %v1483
    %v1485 = vpop.f32.mrb[0].mxu0
    %v1486 = vadd.f32 %v1433, %v1485
    %1487 = vdwg.mxu0
    %1488 = vmatprep.subr.bf16.mxu0 %v1123
    %1489 = vmatpush1.bf16.msra.mxu0 %v1122
    %1490 = vmatprep.subr.bf16.mxu0 0
    %1491 = vmatpush1.bf16.msra.mxu0 0
    %1492 = vmatprep.subr.bf16.mxu0 0
    %1493 = vmatpush1.bf16.msra.mxu0 0
    %1494 = vmatprep.subr.bf16.mxu0 0
    %1495 = vmatpush1.bf16.msra.mxu0 0
    %1496 = vmatprep.subr.bf16.mxu0 0
    %1497 = vmatpush1.bf16.msra.mxu0 0
    %1498 = vmatprep.subr.bf16.mxu0 0
    %1499 = vmatpush1.bf16.msra.mxu0 0
    %1500 = vmatprep.subr.bf16.mxu0 0
    %1501 = vmatpush1.bf16.msra.mxu0 0
    %1502 = vmatprep.subr.bf16.mxu0 0
    %1503 = vmatpush1.bf16.msra.mxu0 0
    %1504 = vmatprep.subr.bf16.mxu0 0
    %1505 = vmatpush1.bf16.msra.mxu0 0
    %1506 = vmatprep.subr.bf16.mxu0 0
    %1507 = vmatpush1.bf16.msra.mxu0 0
    %1508 = vmatprep.subr.bf16.mxu0 0
    %1509 = vmatpush1.bf16.msra.mxu0 0
    %1510 = vmatprep.subr.bf16.mxu0 0
    %1511 = vmatpush1.bf16.msra.mxu0 0
    %1512 = vmatprep.subr.bf16.mxu0 0
    %1513 = vmatpush1.bf16.msra.mxu0 0
    %1514 = vmatprep.subr.bf16.mxu0 0
    %1515 = vmatpush1.bf16.msra.mxu0 0
    %1516 = vmatprep.subr.bf16.mxu0 0
    %1517 = vmatpush1.bf16.msra.mxu0 0
    %1518 = vmatprep.subr.bf16.mxu0 0
    %1519 = vmatpush1.bf16.msra.mxu0 0
    %1520 = vmatprep.mubr.bf16.mxu0 0
    %1521 = vmatmul.mubr.bf16.gmra.mrb[0].mxu0 %v1324
    %v1522 = vpop.f32.mrb[0].mxu0
    %v1523 = vadd.f32 %v1470, %v1522
    %v1524 = vpop.f32.mrb[0].mxu0
    %v1525 = vadd.f32 %v1472, %v1524
    %v1526 = vpop.f32.mrb[0].mxu0
    %v1527 = vadd.f32 %v1474, %v1526
    %v1528 = vpop.f32.mrb[0].mxu0
    %v1529 = vadd.f32 %v1476, %v1528
    %1530 = vmatprep.mubr.bf16.mxu0 0
    %1531 = vmatmul.mubr.bf16.gmra.mrb[0].mxu0 %v1327
    %v1532 = vpop.f32.mrb[0].mxu0
    %v1533 = vadd.f32 %v1480, %v1532
    %v1534 = vpop.f32.mrb[0].mxu0
    %v1535 = vadd.f32 %v1482, %v1534
    %v1536 = vpop.f32.mrb[0].mxu0
    %v1537 = vadd.f32 %v1484, %v1536
    %v1538 = vpop.f32.mrb[0].mxu0
    %v1539 = vadd.f32 %v1486, %v1538
    %1540 = vdwg.mxu0
    %1541 = vmatprep.subr.bf16.mxu0 %v933
    %1542 = vmatpush1.bf16.msra.mxu0 %v932
    %1543 = vmatprep.subr.bf16.mxu0 %v937
    %1544 = vmatpush1.bf16.msra.mxu0 %v936
    %1545 = vmatprep.subr.bf16.mxu0 %v941
    %1546 = vmatpush1.bf16.msra.mxu0 %v940
    %1547 = vmatprep.subr.bf16.mxu0 %v945
    %1548 = vmatpush1.bf16.msra.mxu0 %v944
    %1549 = vmatprep.subr.bf16.mxu0 %v949
    %1550 = vmatpush1.bf16.msra.mxu0 %v948
    %1551 = vmatprep.subr.bf16.mxu0 %v953
    %1552 = vmatpush1.bf16.msra.mxu0 %v952
    %1553 = vmatprep.subr.bf16.mxu0 %v957
    %1554 = vmatpush1.bf16.msra.mxu0 %v956
    %1555 = vmatprep.subr.bf16.mxu0 %v961
    %1556 = vmatpush1.bf16.msra.mxu0 %v960
    %1557 = vmatprep.subr.bf16.mxu0 %v965
    %1558 = vmatpush1.bf16.msra.mxu0 %v964
    %1559 = vmatprep.subr.bf16.mxu0 %v969
    %1560 = vmatpush1.bf16.msra.mxu0 %v968
    %1561 = vmatprep.subr.bf16.mxu0 %v973
    %1562 = vmatpush1.bf16.msra.mxu0 %v972
    %1563 = vmatprep.subr.bf16.mxu0 %v977
    %1564 = vmatpush1.bf16.msra.mxu0 %v976
    %1565 = vmatprep.subr.bf16.mxu0 %v981
    %1566 = vmatpush1.bf16.msra.mxu0 %v980
    %1567 = vmatprep.subr.bf16.mxu0 %v985
    %1568 = vmatpush1.bf16.msra.mxu0 %v984
    %1569 = vmatprep.subr.bf16.mxu0 %v989
    %1570 = vmatpush1.bf16.msra.mxu0 %v988
    %1571 = vmatprep.subr.bf16.mxu0 %v993
    %1572 = vmatpush1.bf16.msra.mxu0 %v992
    %1573 = vmatprep.mubr.bf16.mxu0 %v111
    %1574 = vmatmul.mubr.bf16.gmra.mrb[0].mxu0 %v110
    %v1575 = vpop.f32.mrb[0].mxu0
    %v1576 = vadd.f32 %v333, %v1575
    %v1577 = vpop.f32.mrb[0].mxu0
    %v1578 = vadd.f32 %v337, %v1577
    %v1579 = vpop.f32.mrb[0].mxu0
    %v1580 = vadd.f32 %v333, %v1579
    %v1581 = vpop.f32.mrb[0].mxu0
    %v1582 = vadd.f32 %v337, %v1581
    %1583 = vmatprep.mubr.bf16.mxu0 %v118
    %1584 = vmatmul.mubr.bf16.gmra.mrb[0].mxu0 %v117
    %v1585 = vpop.f32.mrb[0].mxu0
    %v1586 = vadd.f32 %v333, %v1585
    %v1587 = vpop.f32.mrb[0].mxu0
    %v1588 = vadd.f32 %v337, %v1587
    %v1589 = vpop.f32.mrb[0].mxu0
    %v1590 = vadd.f32 %v333, %v1589
    %v1591 = vpop.f32.mrb[0].mxu0
    %v1592 = vadd.f32 %v337, %v1591
    %1593 = vdwg.mxu0
    %1594 = vmatprep.subr.bf16.mxu0 %v997
    %1595 = vmatpush1.bf16.msra.mxu0 %v996
    %1596 = vmatprep.subr.bf16.mxu0 %v1001
    %1597 = vmatpush1.bf16.msra.mxu0 %v1000
    %1598 = vmatprep.subr.bf16.mxu0 %v1005
    %1599 = vmatpush1.bf16.msra.mxu0 %v1004
    %1600 = vmatprep.subr.bf16.mxu0 %v1009
    %1601 = vmatpush1.bf16.msra.mxu0 %v1008
    %1602 = vmatprep.subr.bf16.mxu0 %v1013
    %1603 = vmatpush1.bf16.msra.mxu0 %v1012
    %1604 = vmatprep.subr.bf16.mxu0 %v1017
    %1605 = vmatpush1.bf16.msra.mxu0 %v1016
    %1606 = vmatprep.subr.bf16.mxu0 %v1021
    %1607 = vmatpush1.bf16.msra.mxu0 %v1020
    %1608 = vmatprep.subr.bf16.mxu0 %v1025
    %1609 = vmatpush1.bf16.msra.mxu0 %v1024
    %1610 = vmatprep.subr.bf16.mxu0 %v1029
    %1611 = vmatpush1.bf16.msra.mxu0 %v1028
    %1612 = vmatprep.subr.bf16.mxu0 %v1033
    %1613 = vmatpush1.bf16.msra.mxu0 %v1032
    %1614 = vmatprep.subr.bf16.mxu0 %v1037
    %1615 = vmatpush1.bf16.msra.mxu0 %v1036
    %1616 = vmatprep.subr.bf16.mxu0 %v1041
    %1617 = vmatpush1.bf16.msra.mxu0 %v1040
    %1618 = vmatprep.subr.bf16.mxu0 %v1045
    %1619 = vmatpush1.bf16.msra.mxu0 %v1044
    %1620 = vmatprep.subr.bf16.mxu0 %v1049
    %1621 = vmatpush1.bf16.msra.mxu0 %v1048
    %1622 = vmatprep.subr.bf16.mxu0 %v1053
    %1623 = vmatpush1.bf16.msra.mxu0 %v1052
    %1624 = vmatprep.subr.bf16.mxu0 %v1057
    %1625 = vmatpush1.bf16.msra.mxu0 %v1056
    %1626 = vmatprep.mubr.bf16.mxu0 %v113
    %1627 = vmatmul.mubr.bf16.gmra.mrb[0].mxu0 %v112
    %v1628 = vpop.f32.mrb[0].mxu0
    %v1629 = vadd.f32 %v1576, %v1628
    %v1630 = vpop.f32.mrb[0].mxu0
    %v1631 = vadd.f32 %v1578, %v1630
    %v1632 = vpop.f32.mrb[0].mxu0
    %v1633 = vadd.f32 %v1580, %v1632
    %v1634 = vpop.f32.mrb[0].mxu0
    %v1635 = vadd.f32 %v1582, %v1634
    %1636 = vmatprep.mubr.bf16.mxu0 %v120
    %1637 = vmatmul.mubr.bf16.gmra.mrb[0].mxu0 %v119
    %v1638 = vpop.f32.mrb[0].mxu0
    %v1639 = vadd.f32 %v1586, %v1638
    %v1640 = vpop.f32.mrb[0].mxu0
    %v1641 = vadd.f32 %v1588, %v1640
    %v1642 = vpop.f32.mrb[0].mxu0
    %v1643 = vadd.f32 %v1590, %v1642
    %v1644 = vpop.f32.mrb[0].mxu0
    %v1645 = vadd.f32 %v1592, %v1644
    %1646 = vdwg.mxu0
    %1647 = vmatprep.subr.bf16.mxu0 %v1061
    %1648 = vmatpush1.bf16.msra.mxu0 %v1060
    %1649 = vmatprep.subr.bf16.mxu0 %v1065
    %1650 = vmatpush1.bf16.msra.mxu0 %v1064
    %1651 = vmatprep.subr.bf16.mxu0 %v1069
    %1652 = vmatpush1.bf16.msra.mxu0 %v1068
    %1653 = vmatprep.subr.bf16.mxu0 %v1073
    %1654 = vmatpush1.bf16.msra.mxu0 %v1072
    %1655 = vmatprep.subr.bf16.mxu0 %v1077
    %1656 = vmatpush1.bf16.msra.mxu0 %v1076
    %1657 = vmatprep.subr.bf16.mxu0 %v1081
    %1658 = vmatpush1.bf16.msra.mxu0 %v1080
    %1659 = vmatprep.subr.bf16.mxu0 %v1085
    %1660 = vmatpush1.bf16.msra.mxu0 %v1084
    %1661 = vmatprep.subr.bf16.mxu0 %v1089
    %1662 = vmatpush1.bf16.msra.mxu0 %v1088
    %1663 = vmatprep.subr.bf16.mxu0 %v1093
    %1664 = vmatpush1.bf16.msra.mxu0 %v1092
    %1665 = vmatprep.subr.bf16.mxu0 %v1097
    %1666 = vmatpush1.bf16.msra.mxu0 %v1096
    %1667 = vmatprep.subr.bf16.mxu0 %v1101
    %1668 = vmatpush1.bf16.msra.mxu0 %v1100
    %1669 = vmatprep.subr.bf16.mxu0 %v1105
    %1670 = vmatpush1.bf16.msra.mxu0 %v1104
    %1671 = vmatprep.subr.bf16.mxu0 %v1109
    %1672 = vmatpush1.bf16.msra.mxu0 %v1108
    %1673 = vmatprep.subr.bf16.mxu0 %v1113
    %1674 = vmatpush1.bf16.msra.mxu0 %v1112
    %1675 = vmatprep.subr.bf16.mxu0 %v1117
    %1676 = vmatpush1.bf16.msra.mxu0 %v1116
    %1677 = vmatprep.subr.bf16.mxu0 %v1121
    %1678 = vmatpush1.bf16.msra.mxu0 %v1120
    %1679 = vmatprep.mubr.bf16.mxu0 %v115
    %1680 = vmatmul.mubr.bf16.gmra.mrb[0].mxu0 %v114
    %v1681 = vpop.f32.mrb[0].mxu0
    %v1682 = vadd.f32 %v1629, %v1681
    %v1683 = vpop.f32.mrb[0].mxu0
    %v1684 = vadd.f32 %v1631, %v1683
    %v1685 = vpop.f32.mrb[0].mxu0
    %v1686 = vadd.f32 %v1633, %v1685
    %v1687 = vpop.f32.mrb[0].mxu0
    %v1688 = vadd.f32 %v1635, %v1687
    %1689 = vmatprep.mubr.bf16.mxu0 %v122
    %1690 = vmatmul.mubr.bf16.gmra.mrb[0].mxu0 %v121
    %v1691 = vpop.f32.mrb[0].mxu0
    %v1692 = vadd.f32 %v1639, %v1691
    %v1693 = vpop.f32.mrb[0].mxu0
    %v1694 = vadd.f32 %v1641, %v1693
    %v1695 = vpop.f32.mrb[0].mxu0
    %v1696 = vadd.f32 %v1643, %v1695
    %v1697 = vpop.f32.mrb[0].mxu0
    %v1698 = vadd.f32 %v1645, %v1697
    %1699 = vdwg.mxu0
    %1700 = vmatprep.subr.bf16.mxu0 %v1125
    %1701 = vmatpush1.bf16.msra.mxu0 %v1124
    %1702 = vmatprep.subr.bf16.mxu0 0
    %1703 = vmatpush1.bf16.msra.mxu0 0
    %1704 = vmatprep.subr.bf16.mxu0 0
    %1705 = vmatpush1.bf16.msra.mxu0 0
    %1706 = vmatprep.subr.bf16.mxu0 0
    %1707 = vmatpush1.bf16.msra.mxu0 0
    %1708 = vmatprep.subr.bf16.mxu0 0
    %1709 = vmatpush1.bf16.msra.mxu0 0
    %1710 = vmatprep.subr.bf16.mxu0 0
    %1711 = vmatpush1.bf16.msra.mxu0 0
    %1712 = vmatprep.subr.bf16.mxu0 0
    %1713 = vmatpush1.bf16.msra.mxu0 0
    %1714 = vmatprep.subr.bf16.mxu0 0
    %1715 = vmatpush1.bf16.msra.mxu0 0
    %1716 = vmatprep.subr.bf16.mxu0 0
    %1717 = vmatpush1.bf16.msra.mxu0 0
    %1718 = vmatprep.subr.bf16.mxu0 0
    %1719 = vmatpush1.bf16.msra.mxu0 0
    %1720 = vmatprep.subr.bf16.mxu0 0
    %1721 = vmatpush1.bf16.msra.mxu0 0
    %1722 = vmatprep.subr.bf16.mxu0 0
    %1723 = vmatpush1.bf16.msra.mxu0 0
    %1724 = vmatprep.subr.bf16.mxu0 0
    %1725 = vmatpush1.bf16.msra.mxu0 0
    %1726 = vmatprep.subr.bf16.mxu0 0
    %1727 = vmatpush1.bf16.msra.mxu0 0
    %1728 = vmatprep.subr.bf16.mxu0 0
    %1729 = vmatpush1.bf16.msra.mxu0 0
    %1730 = vmatprep.subr.bf16.mxu0 0
    %1731 = vmatpush1.bf16.msra.mxu0 0
    %1732 = vmatprep.mubr.bf16.mxu0 0
    %1733 = vmatmul.mubr.bf16.gmra.mrb[0].mxu0 %v1324
    %v1734 = vpop.f32.mrb[0].mxu0
    %v1735 = vadd.f32 %v1682, %v1734
    %v1736 = vpop.f32.mrb[0].mxu0
    %v1737 = vadd.f32 %v1684, %v1736
    %v1738 = vpop.f32.mrb[0].mxu0
    %v1739 = vadd.f32 %v1686, %v1738
    %v1740 = vpop.f32.mrb[0].mxu0
    %v1741 = vadd.f32 %v1688, %v1740
    %1742 = vmatprep.mubr.bf16.mxu0 0
    %1743 = vmatmul.mubr.bf16.gmra.mrb[0].mxu0 %v1327
    %v1744 = vpop.f32.mrb[0].mxu0
    %v1745 = vadd.f32 %v1692, %v1744
    %v1746 = vpop.f32.mrb[0].mxu0
    %v1747 = vadd.f32 %v1694, %v1746
    %v1748 = vpop.f32.mrb[0].mxu0
    %v1749 = vadd.f32 %v1696, %v1748
    %v1750 = vpop.f32.mrb[0].mxu0
    %v1751 = vadd.f32 %v1698, %v1750
    %1752 = vdwg.mxu0
    %v1753 = vmax.f32 %v1523, 0.0
    %v1754 = vmax.f32 %v1525, 0.0
    %v1755 = vmax.f32 %v1735, 0.0
    %v1756 = vmax.f32 %v1737, 0.0
    %v1757 = vmax.f32 %v1527, 0.0
    %v1758 = vmax.f32 %v1529, 0.0
    %v1759 = vmax.f32 %v1739, 0.0
    %v1760 = vmax.f32 %v1741, 0.0
    %v1761 = vmax.f32 %v1533, 0.0
    %v1762 = vmax.f32 %v1535, 0.0
    %v1763 = vmax.f32 %v1745, 0.0
    %v1764 = vmax.f32 %v1747, 0.0
    %v1765 = vmax.f32 %v1537, 0.0
    %v1766 = vmax.f32 %v1539, 0.0
    %v1767 = vmax.f32 %v1749, 0.0
    %v1768 = vmax.f32 %v1751, 0.0
    %v1769 = vpack.c.bf16 %v1757, %v1753
    %v1770 = vpack.c.bf16 %v1758, %v1754
    %v1771 = vpack.c.bf16 %v1759, %v1755
    %v1772 = vpack.c.bf16 %v1760, %v1756
    %v1773 = vpack.c.bf16 %v1765, %v1761
    %v1774 = vpack.c.bf16 %v1766, %v1762
    %v1775 = vpack.c.bf16 %v1767, %v1763
    %v1776 = vpack.c.bf16 %v1768, %v1764
    %v1777 = vld [vmem:[#allocation6] sm:$0xff]
    %v1778 = vld [vmem:[#allocation6 + $0x8] sm:$0xff]
    %v1779 = vld [vmem:[#allocation6 + $0x10] sm:$0xff]
    %v1780 = vld [vmem:[#allocation6 + $0x18] sm:$0xff]
    %v1781 = vld [vmem:[#allocation6 + $0x20] sm:$0xff]
    %v1782 = vld [vmem:[#allocation6 + $0x28] sm:$0xff]
    %v1783 = vld [vmem:[#allocation6 + $0x30] sm:$0xff]
    %v1784 = vld [vmem:[#allocation6 + $0x38] sm:$0xff]
    %v1785 = vld [vmem:[#allocation6 + $0x40] sm:$0xff]
    %v1786 = vld [vmem:[#allocation6 + $0x48] sm:$0xff]
    %v1787 = vld [vmem:[#allocation6 + $0x50] sm:$0xff]
    %v1788 = vld [vmem:[#allocation6 + $0x58] sm:$0xff]
    %v1789 = vld [vmem:[#allocation6 + $0x60] sm:$0xff]
    %v1790 = vld [vmem:[#allocation6 + $0x68] sm:$0xff]
    %v1791 = vld [vmem:[#allocation6 + $0x70] sm:$0xff]
    %v1792 = vld [vmem:[#allocation6 + $0x78] sm:$0xff]
    %v1793 = vld [vmem:[#allocation6 + $0x80] sm:$0xff]
    %v1794 = vld [vmem:[#allocation6 + $0x88] sm:$0xff]
    %v1795 = vld [vmem:[#allocation6 + $0x90] sm:$0xff]
    %v1796 = vld [vmem:[#allocation6 + $0x98] sm:$0xff]
    %v1797 = vld [vmem:[#allocation6 + $0xa0] sm:$0xff]
    %v1798 = vld [vmem:[#allocation6 + $0xa8] sm:$0xff]
    %v1799 = vld [vmem:[#allocation6 + $0xb0] sm:$0xff]
    %v1800 = vld [vmem:[#allocation6 + $0xb8] sm:$0xff]
    %v1801 = vld [vmem:[#allocation6 + $0xc0] sm:$0xff]
    %v1802 = vld [vmem:[#allocation6 + $0xc8] sm:$0xff]
    %v1803 = vld [vmem:[#allocation6 + $0xd0] sm:$0xff]
    %v1804 = vld [vmem:[#allocation6 + $0xd8] sm:$0xff]
    %v1805 = vld [vmem:[#allocation6 + $0xe0] sm:$0xff]
    %v1806 = vld [vmem:[#allocation6 + $0xe8] sm:$0xff]
    %v1807 = vld [vmem:[#allocation6 + $0xf0] sm:$0xff]
    %v1808 = vld [vmem:[#allocation6 + $0xf8] sm:$0xff]
    %v1809 = vld [vmem:[#allocation6 + $0x100] sm:$0xff]
    %v1810 = vld [vmem:[#allocation6 + $0x108] sm:$0xff]
    %v1811 = vld [vmem:[#allocation6 + $0x110] sm:$0xff]
    %v1812 = vld [vmem:[#allocation6 + $0x118] sm:$0xff]
    %v1813 = vld [vmem:[#allocation6 + $0x120] sm:$0xff]
    %v1814 = vld [vmem:[#allocation6 + $0x128] sm:$0xff]
    %v1815 = vld [vmem:[#allocation6 + $0x130] sm:$0xff]
    %v1816 = vld [vmem:[#allocation6 + $0x138] sm:$0xff]
    %v1817 = vld [vmem:[#allocation6 + $0x140] sm:$0xff]
    %v1818 = vld [vmem:[#allocation6 + $0x148] sm:$0xff]
    %v1819 = vld [vmem:[#allocation6 + $0x150] sm:$0xff]
    %v1820 = vld [vmem:[#allocation6 + $0x158] sm:$0xff]
    %v1821 = vld [vmem:[#allocation6 + $0x160] sm:$0xff]
    %v1822 = vld [vmem:[#allocation6 + $0x168] sm:$0xff]
    %v1823 = vld [vmem:[#allocation6 + $0x170] sm:$0xff]
    %v1824 = vld [vmem:[#allocation6 + $0x178] sm:$0xff]
    %v1825 = vld [vmem:[#allocation6 + $0x180] sm:$0xff]
    %v1826 = vld [vmem:[#allocation6 + $0x188] sm:$0xff]
    %v1827 = vld [vmem:[#allocation6 + $0x190] sm:$0xff]
    %v1828 = vld [vmem:[#allocation6 + $0x198] sm:$0xff]
    %v1829 = vld [vmem:[#allocation6 + $0x1a0] sm:$0xff]
    %v1830 = vld [vmem:[#allocation6 + $0x1a8] sm:$0xff]
    %v1831 = vld [vmem:[#allocation6 + $0x1b0] sm:$0xff]
    %v1832 = vld [vmem:[#allocation6 + $0x1b8] sm:$0xff]
    %v1833 = vld [vmem:[#allocation6 + $0x1c0] sm:$0xff]
    %v1834 = vld [vmem:[#allocation6 + $0x1c8] sm:$0xff]
    %v1835 = vld [vmem:[#allocation6 + $0x1d0] sm:$0xff]
    %v1836 = vld [vmem:[#allocation6 + $0x1d8] sm:$0xff]
    %v1837 = vld [vmem:[#allocation6 + $0x1e0] sm:$0xff]
    %v1838 = vld [vmem:[#allocation6 + $0x1e8] sm:$0xff]
    %v1839 = vld [vmem:[#allocation6 + $0x1f0] sm:$0xff]
    %v1840 = vld [vmem:[#allocation6 + $0x1f8] sm:$0xff]
    %v1841 = vld [vmem:[#allocation6 + $0x200] sm:$0xff]
    %v1842 = vld [vmem:[#allocation6 + $0x208] sm:$0xff]
    %v1843 = vld [vmem:[#allocation6 + $0x210] sm:$0xff]
    %v1844 = vld [vmem:[#allocation6 + $0x218] sm:$0xff]
    %v1845 = vld [vmem:[#allocation6 + $0x220] sm:$0xff]
    %v1846 = vld [vmem:[#allocation6 + $0x228] sm:$0xff]
    %v1847 = vld [vmem:[#allocation6 + $0x230] sm:$0xff]
    %v1848 = vld [vmem:[#allocation6 + $0x238] sm:$0xff]
    %v1849 = vld [vmem:[#allocation6 + $0x240] sm:$0xff]
    %v1850 = vld [vmem:[#allocation6 + $0x248] sm:$0xff]
    %v1851 = vld [vmem:[#allocation6 + $0x250] sm:$0xff]
    %v1852 = vld [vmem:[#allocation6 + $0x258] sm:$0xff]
    %v1853 = vld [vmem:[#allocation6 + $0x260] sm:$0xff]
    %v1854 = vld [vmem:[#allocation6 + $0x268] sm:$0xff]
    %v1855 = vld [vmem:[#allocation6 + $0x270] sm:$0xff]
    %v1856 = vld [vmem:[#allocation6 + $0x278] sm:$0xff]
    %v1857 = vld [vmem:[#allocation6 + $0x280] sm:$0xff]
    %v1858 = vld [vmem:[#allocation6 + $0x288] sm:$0xff]
    %v1859 = vld [vmem:[#allocation6 + $0x290] sm:$0xff]
    %v1860 = vld [vmem:[#allocation6 + $0x298] sm:$0xff]
    %v1861 = vld [vmem:[#allocation6 + $0x2a0] sm:$0xff]
    %v1862 = vld [vmem:[#allocation6 + $0x2a8] sm:$0xff]
    %v1863 = vld [vmem:[#allocation6 + $0x2b0] sm:$0xff]
    %v1864 = vld [vmem:[#allocation6 + $0x2b8] sm:$0xff]
    %v1865 = vld [vmem:[#allocation6 + $0x2c0] sm:$0xff]
    %v1866 = vld [vmem:[#allocation6 + $0x2c8] sm:$0xff]
    %v1867 = vld [vmem:[#allocation6 + $0x2d0] sm:$0xff]
    %v1868 = vld [vmem:[#allocation6 + $0x2d8] sm:$0xff]
    %v1869 = vld [vmem:[#allocation6 + $0x2e0] sm:$0xff]
    %v1870 = vld [vmem:[#allocation6 + $0x2e8] sm:$0xff]
    %v1871 = vld [vmem:[#allocation6 + $0x2f0] sm:$0xff]
    %v1872 = vld [vmem:[#allocation6 + $0x2f8] sm:$0xff]
    %v1873 = vld [vmem:[#allocation6 + $0x300] sm:$0xff]
    %v1874 = vld [vmem:[#allocation6 + $0x308] sm:$0xff]
    %v1875 = vld [vmem:[#allocation6 + $0x310] sm:$0xff]
    %v1876 = vld [vmem:[#allocation6 + $0x318] sm:$0xff]
    %v1877 = vld [vmem:[#allocation6 + $0x320] sm:$0xff]
    %v1878 = vld [vmem:[#allocation6 + $0x328] sm:$0xff]
    %v1879 = vld [vmem:[#allocation6 + $0x330] sm:$0xff]
    %v1880 = vld [vmem:[#allocation6 + $0x338] sm:$0xff]
    %v1881 = vld [vmem:[#allocation6 + $0x340] sm:$0xff]
    %v1882 = vld [vmem:[#allocation6 + $0x348] sm:$0xff]
    %v1883 = vld [vmem:[#allocation6 + $0x350] sm:$0xff]
    %v1884 = vld [vmem:[#allocation6 + $0x358] sm:$0xff]
    %v1885 = vld [vmem:[#allocation6 + $0x360] sm:$0xff]
    %v1886 = vld [vmem:[#allocation6 + $0x368] sm:$0xff]
    %v1887 = vld [vmem:[#allocation6 + $0x370] sm:$0xff]
    %v1888 = vld [vmem:[#allocation6 + $0x378] sm:$0xff]
    %v1889 = vld [vmem:[#allocation6 + $0x380] sm:$0xff]
    %v1890 = vld [vmem:[#allocation6 + $0x388] sm:$0xff]
    %v1891 = vld [vmem:[#allocation6 + $0x390] sm:$0xff]
    %v1892 = vld [vmem:[#allocation6 + $0x398] sm:$0xff]
    %v1893 = vld [vmem:[#allocation6 + $0x3a0] sm:$0xff]
    %v1894 = vld [vmem:[#allocation6 + $0x3a8] sm:$0xff]
    %v1895 = vld [vmem:[#allocation6 + $0x3b0] sm:$0xff]
    %v1896 = vld [vmem:[#allocation6 + $0x3b8] sm:$0xff]
    %v1897 = vld [vmem:[#allocation6 + $0x3c0] sm:$0xff]
    %v1898 = vld [vmem:[#allocation6 + $0x3c8] sm:$0xff]
    %v1899 = vld [vmem:[#allocation6 + $0x3d0] sm:$0xff]
    %v1900 = vld [vmem:[#allocation6 + $0x3d8] sm:$0xff]
    %v1901 = vld [vmem:[#allocation6 + $0x3e0] sm:$0xff]
    %v1902 = vld [vmem:[#allocation6 + $0x3e8] sm:$0xff]
    %v1903 = vld [vmem:[#allocation6 + $0x3f0] sm:$0xff]
    %v1904 = vld [vmem:[#allocation6 + $0x3f8] sm:$0xff]
    %v1905 = vld [vmem:[%s4] sm:$0xf]
    %v1907 = vlaneseq
    %v1908 = vshrl.u32 %v1907, 7
    %v1909 = vsub.s32 0, %v1908
    %v1910 = vrot.slane %v1905, %v1909
    %v1911 = vlaneseq
    %v1912 = vshrl.u32 %v1911, 7
    %v1913 = vsub.s32 1, %v1912
    %v1914 = vrot.slane %v1905, %v1913
    %v1915 = vlaneseq
    %v1916 = vshrl.u32 %v1915, 7
    %v1917 = vsub.s32 2, %v1916
    %v1918 = vrot.slane %v1905, %v1917
    %v1919 = vlaneseq
    %v1920 = vshrl.u32 %v1919, 7
    %v1921 = vsub.s32 3, %v1920
    %v1922 = vrot.slane %v1905, %v1921
    %v2055 = vunpack.c.l.b16 %v1777
    %v2056 = vunpack.c.h.b16 %v1777
    %v2057 = vunpack.c.l.b16 %v1778
    %v2058 = vunpack.c.h.b16 %v1778
    %v2059 = vunpack.c.l.b16 %v1779
    %v2060 = vunpack.c.h.b16 %v1779
    %v2061 = vunpack.c.l.b16 %v1780
    %v2062 = vunpack.c.h.b16 %v1780
    %v2063 = vunpack.c.l.b16 %v1781
    %v2064 = vunpack.c.h.b16 %v1781
    %v2065 = vunpack.c.l.b16 %v1782
    %v2066 = vunpack.c.h.b16 %v1782
    %v2067 = vunpack.c.l.b16 %v1783
    %v2068 = vunpack.c.h.b16 %v1783
    %v2069 = vunpack.c.l.b16 %v1784
    %v2070 = vunpack.c.h.b16 %v1784
    %v2071 = vunpack.c.l.b16 %v1785
    %v2072 = vunpack.c.h.b16 %v1785
    %v2073 = vunpack.c.l.b16 %v1786
    %v2074 = vunpack.c.h.b16 %v1786
    %v2075 = vunpack.c.l.b16 %v1787
    %v2076 = vunpack.c.h.b16 %v1787
    %v2077 = vunpack.c.l.b16 %v1788
    %v2078 = vunpack.c.h.b16 %v1788
    %v2079 = vunpack.c.l.b16 %v1789
    %v2080 = vunpack.c.h.b16 %v1789
    %v2081 = vunpack.c.l.b16 %v1790
    %v2082 = vunpack.c.h.b16 %v1790
    %v2083 = vunpack.c.l.b16 %v1791
    %v2084 = vunpack.c.h.b16 %v1791
    %v2085 = vunpack.c.l.b16 %v1792
    %v2086 = vunpack.c.h.b16 %v1792
    %v2087 = vunpack.c.l.b16 %v1793
    %v2088 = vunpack.c.h.b16 %v1793
    %v2089 = vunpack.c.l.b16 %v1794
    %v2090 = vunpack.c.h.b16 %v1794
    %v2091 = vunpack.c.l.b16 %v1795
    %v2092 = vunpack.c.h.b16 %v1795
    %v2093 = vunpack.c.l.b16 %v1796
    %v2094 = vunpack.c.h.b16 %v1796
    %v2095 = vunpack.c.l.b16 %v1797
    %v2096 = vunpack.c.h.b16 %v1797
    %v2097 = vunpack.c.l.b16 %v1798
    %v2098 = vunpack.c.h.b16 %v1798
    %v2099 = vunpack.c.l.b16 %v1799
    %v2100 = vunpack.c.h.b16 %v1799
    %v2101 = vunpack.c.l.b16 %v1800
    %v2102 = vunpack.c.h.b16 %v1800
    %v2103 = vunpack.c.l.b16 %v1801
    %v2104 = vunpack.c.h.b16 %v1801
    %v2105 = vunpack.c.l.b16 %v1802
    %v2106 = vunpack.c.h.b16 %v1802
    %v2107 = vunpack.c.l.b16 %v1803
    %v2108 = vunpack.c.h.b16 %v1803
    %v2109 = vunpack.c.l.b16 %v1804
    %v2110 = vunpack.c.h.b16 %v1804
    %v2111 = vunpack.c.l.b16 %v1805
    %v2112 = vunpack.c.h.b16 %v1805
    %v2113 = vunpack.c.l.b16 %v1806
    %v2114 = vunpack.c.h.b16 %v1806
    %v2115 = vunpack.c.l.b16 %v1807
    %v2116 = vunpack.c.h.b16 %v1807
    %v2117 = vunpack.c.l.b16 %v1808
    %v2118 = vunpack.c.h.b16 %v1808
    %v2119 = vunpack.c.l.b16 %v1809
    %v2120 = vunpack.c.h.b16 %v1809
    %v2121 = vunpack.c.l.b16 %v1810
    %v2122 = vunpack.c.h.b16 %v1810
    %v2123 = vunpack.c.l.b16 %v1811
    %v2124 = vunpack.c.h.b16 %v1811
    %v2125 = vunpack.c.l.b16 %v1812
    %v2126 = vunpack.c.h.b16 %v1812
    %v2127 = vunpack.c.l.b16 %v1813
    %v2128 = vunpack.c.h.b16 %v1813
    %v2129 = vunpack.c.l.b16 %v1814
    %v2130 = vunpack.c.h.b16 %v1814
    %v2131 = vunpack.c.l.b16 %v1815
    %v2132 = vunpack.c.h.b16 %v1815
    %v2133 = vunpack.c.l.b16 %v1816
    %v2134 = vunpack.c.h.b16 %v1816
    %v2135 = vunpack.c.l.b16 %v1817
    %v2136 = vunpack.c.h.b16 %v1817
    %v2137 = vunpack.c.l.b16 %v1818
    %v2138 = vunpack.c.h.b16 %v1818
    %v2139 = vunpack.c.l.b16 %v1819
    %v2140 = vunpack.c.h.b16 %v1819
    %v2141 = vunpack.c.l.b16 %v1820
    %v2142 = vunpack.c.h.b16 %v1820
    %v2143 = vunpack.c.l.b16 %v1821
    %v2144 = vunpack.c.h.b16 %v1821
    %v2145 = vunpack.c.l.b16 %v1822
    %v2146 = vunpack.c.h.b16 %v1822
    %v2147 = vunpack.c.l.b16 %v1823
    %v2148 = vunpack.c.h.b16 %v1823
    %v2149 = vunpack.c.l.b16 %v1824
    %v2150 = vunpack.c.h.b16 %v1824
    %v2151 = vunpack.c.l.b16 %v1825
    %v2152 = vunpack.c.h.b16 %v1825
    %v2153 = vunpack.c.l.b16 %v1826
    %v2154 = vunpack.c.h.b16 %v1826
    %v2155 = vunpack.c.l.b16 %v1827
    %v2156 = vunpack.c.h.b16 %v1827
    %v2157 = vunpack.c.l.b16 %v1828
    %v2158 = vunpack.c.h.b16 %v1828
    %v2159 = vunpack.c.l.b16 %v1829
    %v2160 = vunpack.c.h.b16 %v1829
    %v2161 = vunpack.c.l.b16 %v1830
    %v2162 = vunpack.c.h.b16 %v1830
    %v2163 = vunpack.c.l.b16 %v1831
    %v2164 = vunpack.c.h.b16 %v1831
    %v2165 = vunpack.c.l.b16 %v1832
    %v2166 = vunpack.c.h.b16 %v1832
    %v2167 = vunpack.c.l.b16 %v1833
    %v2168 = vunpack.c.h.b16 %v1833
    %v2169 = vunpack.c.l.b16 %v1834
    %v2170 = vunpack.c.h.b16 %v1834
    %v2171 = vunpack.c.l.b16 %v1835
    %v2172 = vunpack.c.h.b16 %v1835
    %v2173 = vunpack.c.l.b16 %v1836
    %v2174 = vunpack.c.h.b16 %v1836
    %v2175 = vunpack.c.l.b16 %v1837
    %v2176 = vunpack.c.h.b16 %v1837
    %v2177 = vunpack.c.l.b16 %v1838
    %v2178 = vunpack.c.h.b16 %v1838
    %v2179 = vunpack.c.l.b16 %v1839
    %v2180 = vunpack.c.h.b16 %v1839
    %v2181 = vunpack.c.l.b16 %v1840
    %v2182 = vunpack.c.h.b16 %v1840
    %v2183 = vunpack.c.l.b16 %v1841
    %v2184 = vunpack.c.h.b16 %v1841
    %v2185 = vunpack.c.l.b16 %v1842
    %v2186 = vunpack.c.h.b16 %v1842
    %v2187 = vunpack.c.l.b16 %v1843
    %v2188 = vunpack.c.h.b16 %v1843
    %v2189 = vunpack.c.l.b16 %v1844
    %v2190 = vunpack.c.h.b16 %v1844
    %v2191 = vunpack.c.l.b16 %v1845
    %v2192 = vunpack.c.h.b16 %v1845
    %v2193 = vunpack.c.l.b16 %v1846
    %v2194 = vunpack.c.h.b16 %v1846
    %v2195 = vunpack.c.l.b16 %v1847
    %v2196 = vunpack.c.h.b16 %v1847
    %v2197 = vunpack.c.l.b16 %v1848
    %v2198 = vunpack.c.h.b16 %v1848
    %v2199 = vunpack.c.l.b16 %v1849
    %v2200 = vunpack.c.h.b16 %v1849
    %v2201 = vunpack.c.l.b16 %v1850
    %v2202 = vunpack.c.h.b16 %v1850
    %v2203 = vunpack.c.l.b16 %v1851
    %v2204 = vunpack.c.h.b16 %v1851
    %v2205 = vunpack.c.l.b16 %v1852
    %v2206 = vunpack.c.h.b16 %v1852
    %v2207 = vunpack.c.l.b16 %v1853
    %v2208 = vunpack.c.h.b16 %v1853
    %v2209 = vunpack.c.l.b16 %v1854
    %v2210 = vunpack.c.h.b16 %v1854
    %v2211 = vunpack.c.l.b16 %v1855
    %v2212 = vunpack.c.h.b16 %v1855
    %v2213 = vunpack.c.l.b16 %v1856
    %v2214 = vunpack.c.h.b16 %v1856
    %v2215 = vunpack.c.l.b16 %v1857
    %v2216 = vunpack.c.h.b16 %v1857
    %v2217 = vunpack.c.l.b16 %v1858
    %v2218 = vunpack.c.h.b16 %v1858
    %v2219 = vunpack.c.l.b16 %v1859
    %v2220 = vunpack.c.h.b16 %v1859
    %v2221 = vunpack.c.l.b16 %v1860
    %v2222 = vunpack.c.h.b16 %v1860
    %v2223 = vunpack.c.l.b16 %v1861
    %v2224 = vunpack.c.h.b16 %v1861
    %v2225 = vunpack.c.l.b16 %v1862
    %v2226 = vunpack.c.h.b16 %v1862
    %v2227 = vunpack.c.l.b16 %v1863
    %v2228 = vunpack.c.h.b16 %v1863
    %v2229 = vunpack.c.l.b16 %v1864
    %v2230 = vunpack.c.h.b16 %v1864
    %v2231 = vunpack.c.l.b16 %v1865
    %v2232 = vunpack.c.h.b16 %v1865
    %v2233 = vunpack.c.l.b16 %v1866
    %v2234 = vunpack.c.h.b16 %v1866
    %v2235 = vunpack.c.l.b16 %v1867
    %v2236 = vunpack.c.h.b16 %v1867
    %v2237 = vunpack.c.l.b16 %v1868
    %v2238 = vunpack.c.h.b16 %v1868
    %v2239 = vunpack.c.l.b16 %v1869
    %v2240 = vunpack.c.h.b16 %v1869
    %v2241 = vunpack.c.l.b16 %v1870
    %v2242 = vunpack.c.h.b16 %v1870
    %v2243 = vunpack.c.l.b16 %v1871
    %v2244 = vunpack.c.h.b16 %v1871
    %v2245 = vunpack.c.l.b16 %v1872
    %v2246 = vunpack.c.h.b16 %v1872
    %v2247 = vunpack.c.l.b16 %v1873
    %v2248 = vunpack.c.h.b16 %v1873
    %v2249 = vunpack.c.l.b16 %v1874
    %v2250 = vunpack.c.h.b16 %v1874
    %v2251 = vunpack.c.l.b16 %v1875
    %v2252 = vunpack.c.h.b16 %v1875
    %v2253 = vunpack.c.l.b16 %v1876
    %v2254 = vunpack.c.h.b16 %v1876
    %v2255 = vunpack.c.l.b16 %v1877
    %v2256 = vunpack.c.h.b16 %v1877
    %v2257 = vunpack.c.l.b16 %v1878
    %v2258 = vunpack.c.h.b16 %v1878
    %v2259 = vunpack.c.l.b16 %v1879
    %v2260 = vunpack.c.h.b16 %v1879
    %v2261 = vunpack.c.l.b16 %v1880
    %v2262 = vunpack.c.h.b16 %v1880
    %v2263 = vunpack.c.l.b16 %v1881
    %v2264 = vunpack.c.h.b16 %v1881
    %v2265 = vunpack.c.l.b16 %v1882
    %v2266 = vunpack.c.h.b16 %v1882
    %v2267 = vunpack.c.l.b16 %v1883
    %v2268 = vunpack.c.h.b16 %v1883
    %v2269 = vunpack.c.l.b16 %v1884
    %v2270 = vunpack.c.h.b16 %v1884
    %v2271 = vunpack.c.l.b16 %v1885
    %v2272 = vunpack.c.h.b16 %v1885
    %v2273 = vunpack.c.l.b16 %v1886
    %v2274 = vunpack.c.h.b16 %v1886
    %v2275 = vunpack.c.l.b16 %v1887
    %v2276 = vunpack.c.h.b16 %v1887
    %v2277 = vunpack.c.l.b16 %v1888
    %v2278 = vunpack.c.h.b16 %v1888
    %v2279 = vunpack.c.l.b16 %v1889
    %v2280 = vunpack.c.h.b16 %v1889
    %v2281 = vunpack.c.l.b16 %v1890
    %v2282 = vunpack.c.h.b16 %v1890
    %v2283 = vunpack.c.l.b16 %v1891
    %v2284 = vunpack.c.h.b16 %v1891
    %v2285 = vunpack.c.l.b16 %v1892
    %v2286 = vunpack.c.h.b16 %v1892
    %v2287 = vunpack.c.l.b16 %v1893
    %v2288 = vunpack.c.h.b16 %v1893
    %v2289 = vunpack.c.l.b16 %v1894
    %v2290 = vunpack.c.h.b16 %v1894
    %v2291 = vunpack.c.l.b16 %v1895
    %v2292 = vunpack.c.h.b16 %v1895
    %v2293 = vunpack.c.l.b16 %v1896
    %v2294 = vunpack.c.h.b16 %v1896
    %v2295 = vunpack.c.l.b16 %v1897
    %v2296 = vunpack.c.h.b16 %v1897
    %v2297 = vunpack.c.l.b16 %v1898
    %v2298 = vunpack.c.h.b16 %v1898
    %v2299 = vunpack.c.l.b16 %v1899
    %v2300 = vunpack.c.h.b16 %v1899
    %v2301 = vunpack.c.l.b16 %v1900
    %v2302 = vunpack.c.h.b16 %v1900
    %v2303 = vunpack.c.l.b16 %v1901
    %v2304 = vunpack.c.h.b16 %v1901
    %v2305 = vunpack.c.l.b16 %v1902
    %v2306 = vunpack.c.h.b16 %v1902
    %v2307 = vunpack.c.l.b16 %v1903
    %v2308 = vunpack.c.h.b16 %v1903
    %v2309 = vunpack.c.l.b16 %v1904
    %v2310 = vunpack.c.h.b16 %v1904
    %v2311 = vpack.c.b16 %v2059, %v2055
    %v2312 = vpack.c.b16 %v2060, %v2056
    %v2313 = vpack.c.b16 %v2061, %v2057
    %v2314 = vpack.c.b16 %v2062, %v2058
    %v2315 = vpack.c.b16 %v2067, %v2063
    %v2316 = vpack.c.b16 %v2068, %v2064
    %v2317 = vpack.c.b16 %v2069, %v2065
    %v2318 = vpack.c.b16 %v2070, %v2066
    %v2319 = vpack.c.b16 %v2075, %v2071
    %v2320 = vpack.c.b16 %v2076, %v2072
    %v2321 = vpack.c.b16 %v2077, %v2073
    %v2322 = vpack.c.b16 %v2078, %v2074
    %v2323 = vpack.c.b16 %v2083, %v2079
    %v2324 = vpack.c.b16 %v2084, %v2080
    %v2325 = vpack.c.b16 %v2085, %v2081
    %v2326 = vpack.c.b16 %v2086, %v2082
    %v2327 = vpack.c.b16 %v2091, %v2087
    %v2328 = vpack.c.b16 %v2092, %v2088
    %v2329 = vpack.c.b16 %v2093, %v2089
    %v2330 = vpack.c.b16 %v2094, %v2090
    %v2331 = vpack.c.b16 %v2099, %v2095
    %v2332 = vpack.c.b16 %v2100, %v2096
    %v2333 = vpack.c.b16 %v2101, %v2097
    %v2334 = vpack.c.b16 %v2102, %v2098
    %v2335 = vpack.c.b16 %v2107, %v2103
    %v2336 = vpack.c.b16 %v2108, %v2104
    %v2337 = vpack.c.b16 %v2109, %v2105
    %v2338 = vpack.c.b16 %v2110, %v2106
    %v2339 = vpack.c.b16 %v2115, %v2111
    %v2340 = vpack.c.b16 %v2116, %v2112
    %v2341 = vpack.c.b16 %v2117, %v2113
    %v2342 = vpack.c.b16 %v2118, %v2114
    %v2343 = vpack.c.b16 %v2123, %v2119
    %v2344 = vpack.c.b16 %v2124, %v2120
    %v2345 = vpack.c.b16 %v2125, %v2121
    %v2346 = vpack.c.b16 %v2126, %v2122
    %v2347 = vpack.c.b16 %v2131, %v2127
    %v2348 = vpack.c.b16 %v2132, %v2128
    %v2349 = vpack.c.b16 %v2133, %v2129
    %v2350 = vpack.c.b16 %v2134, %v2130
    %v2351 = vpack.c.b16 %v2139, %v2135
    %v2352 = vpack.c.b16 %v2140, %v2136
    %v2353 = vpack.c.b16 %v2141, %v2137
    %v2354 = vpack.c.b16 %v2142, %v2138
    %v2355 = vpack.c.b16 %v2147, %v2143
    %v2356 = vpack.c.b16 %v2148, %v2144
    %v2357 = vpack.c.b16 %v2149, %v2145
    %v2358 = vpack.c.b16 %v2150, %v2146
    %v2359 = vpack.c.b16 %v2155, %v2151
    %v2360 = vpack.c.b16 %v2156, %v2152
    %v2361 = vpack.c.b16 %v2157, %v2153
    %v2362 = vpack.c.b16 %v2158, %v2154
    %v2363 = vpack.c.b16 %v2163, %v2159
    %v2364 = vpack.c.b16 %v2164, %v2160
    %v2365 = vpack.c.b16 %v2165, %v2161
    %v2366 = vpack.c.b16 %v2166, %v2162
    %v2367 = vpack.c.b16 %v2171, %v2167
    %v2368 = vpack.c.b16 %v2172, %v2168
    %v2369 = vpack.c.b16 %v2173, %v2169
    %v2370 = vpack.c.b16 %v2174, %v2170
    %v2371 = vpack.c.b16 %v2179, %v2175
    %v2372 = vpack.c.b16 %v2180, %v2176
    %v2373 = vpack.c.b16 %v2181, %v2177
    %v2374 = vpack.c.b16 %v2182, %v2178
    %v2375 = vpack.c.b16 %v2187, %v2183
    %v2376 = vpack.c.b16 %v2188, %v2184
    %v2377 = vpack.c.b16 %v2189, %v2185
    %v2378 = vpack.c.b16 %v2190, %v2186
    %v2379 = vpack.c.b16 %v2195, %v2191
    %v2380 = vpack.c.b16 %v2196, %v2192
    %v2381 = vpack.c.b16 %v2197, %v2193
    %v2382 = vpack.c.b16 %v2198, %v2194
    %v2383 = vpack.c.b16 %v2203, %v2199
    %v2384 = vpack.c.b16 %v2204, %v2200
    %v2385 = vpack.c.b16 %v2205, %v2201
    %v2386 = vpack.c.b16 %v2206, %v2202
    %v2387 = vpack.c.b16 %v2211, %v2207
    %v2388 = vpack.c.b16 %v2212, %v2208
    %v2389 = vpack.c.b16 %v2213, %v2209
    %v2390 = vpack.c.b16 %v2214, %v2210
    %v2391 = vpack.c.b16 %v2219, %v2215
    %v2392 = vpack.c.b16 %v2220, %v2216
    %v2393 = vpack.c.b16 %v2221, %v2217
    %v2394 = vpack.c.b16 %v2222, %v2218
    %v2395 = vpack.c.b16 %v2227, %v2223
    %v2396 = vpack.c.b16 %v2228, %v2224
    %v2397 = vpack.c.b16 %v2229, %v2225
    %v2398 = vpack.c.b16 %v2230, %v2226
    %v2399 = vpack.c.b16 %v2235, %v2231
    %v2400 = vpack.c.b16 %v2236, %v2232
    %v2401 = vpack.c.b16 %v2237, %v2233
    %v2402 = vpack.c.b16 %v2238, %v2234
    %v2403 = vpack.c.b16 %v2243, %v2239
    %v2404 = vpack.c.b16 %v2244, %v2240
    %v2405 = vpack.c.b16 %v2245, %v2241
    %v2406 = vpack.c.b16 %v2246, %v2242
    %v2407 = vpack.c.b16 %v2251, %v2247
    %v2408 = vpack.c.b16 %v2252, %v2248
    %v2409 = vpack.c.b16 %v2253, %v2249
    %v2410 = vpack.c.b16 %v2254, %v2250
    %v2411 = vpack.c.b16 %v2259, %v2255
    %v2412 = vpack.c.b16 %v2260, %v2256
    %v2413 = vpack.c.b16 %v2261, %v2257
    %v2414 = vpack.c.b16 %v2262, %v2258
    %v2415 = vpack.c.b16 %v2267, %v2263
    %v2416 = vpack.c.b16 %v2268, %v2264
    %v2417 = vpack.c.b16 %v2269, %v2265
    %v2418 = vpack.c.b16 %v2270, %v2266
    %v2419 = vpack.c.b16 %v2275, %v2271
    %v2420 = vpack.c.b16 %v2276, %v2272
    %v2421 = vpack.c.b16 %v2277, %v2273
    %v2422 = vpack.c.b16 %v2278, %v2274
    %v2423 = vpack.c.b16 %v2283, %v2279
    %v2424 = vpack.c.b16 %v2284, %v2280
    %v2425 = vpack.c.b16 %v2285, %v2281
    %v2426 = vpack.c.b16 %v2286, %v2282
    %v2427 = vpack.c.b16 %v2291, %v2287
    %v2428 = vpack.c.b16 %v2292, %v2288
    %v2429 = vpack.c.b16 %v2293, %v2289
    %v2430 = vpack.c.b16 %v2294, %v2290
    %v2431 = vpack.c.b16 %v2299, %v2295
    %v2432 = vpack.c.b16 %v2300, %v2296
    %v2433 = vpack.c.b16 %v2301, %v2297
    %v2434 = vpack.c.b16 %v2302, %v2298
    %v2435 = vpack.c.b16 %v2307, %v2303
    %v2436 = vpack.c.b16 %v2308, %v2304
    %v2437 = vpack.c.b16 %v2309, %v2305
    %v2438 = vpack.c.b16 %v2310, %v2306
    %2567 = vmatprep.subr.bf16.mxu0 %v2312
    %2568 = vmatpush1.bf16.msra.mxu0 %v2311
    %2569 = vmatprep.subr.bf16.mxu0 %v2316
    %2570 = vmatpush1.bf16.msra.mxu0 %v2315
    %2571 = vmatprep.subr.bf16.mxu0 %v2320
    %2572 = vmatpush1.bf16.msra.mxu0 %v2319
    %2573 = vmatprep.subr.bf16.mxu0 %v2324
    %2574 = vmatpush1.bf16.msra.mxu0 %v2323
    %2575 = vmatprep.subr.bf16.mxu0 %v2328
    %2576 = vmatpush1.bf16.msra.mxu0 %v2327
    %2577 = vmatprep.subr.bf16.mxu0 %v2332
    %2578 = vmatpush1.bf16.msra.mxu0 %v2331
    %2579 = vmatprep.subr.bf16.mxu0 %v2336
    %2580 = vmatpush1.bf16.msra.mxu0 %v2335
    %2581 = vmatprep.subr.bf16.mxu0 %v2340
    %2582 = vmatpush1.bf16.msra.mxu0 %v2339
    %2583 = vmatprep.subr.bf16.mxu0 %v2344
    %2584 = vmatpush1.bf16.msra.mxu0 %v2343
    %2585 = vmatprep.subr.bf16.mxu0 %v2348
    %2586 = vmatpush1.bf16.msra.mxu0 %v2347
    %2587 = vmatprep.subr.bf16.mxu0 %v2352
    %2588 = vmatpush1.bf16.msra.mxu0 %v2351
    %2589 = vmatprep.subr.bf16.mxu0 %v2356
    %2590 = vmatpush1.bf16.msra.mxu0 %v2355
    %2591 = vmatprep.subr.bf16.mxu0 %v2360
    %2592 = vmatpush1.bf16.msra.mxu0 %v2359
    %2593 = vmatprep.subr.bf16.mxu0 %v2364
    %2594 = vmatpush1.bf16.msra.mxu0 %v2363
    %2595 = vmatprep.subr.bf16.mxu0 %v2368
    %2596 = vmatpush1.bf16.msra.mxu0 %v2367
    %2597 = vmatprep.subr.bf16.mxu0 %v2372
    %2598 = vmatpush1.bf16.msra.mxu0 %v2371
    %2599 = vmatprep.mubr.bf16.mxu0 %v1770
    %2600 = vmatmul.mubr.bf16.gmra.mrb[0].mxu0 %v1769
    %v2601 = vpop.f32.mrb[0].mxu0
    %v2602 = vadd.f32 %v1910, %v2601
    %v2603 = vpop.f32.mrb[0].mxu0
    %v2604 = vadd.f32 %v1914, %v2603
    %v2605 = vpop.f32.mrb[0].mxu0
    %v2606 = vadd.f32 %v1910, %v2605
    %v2607 = vpop.f32.mrb[0].mxu0
    %v2608 = vadd.f32 %v1914, %v2607
    %2609 = vmatprep.mubr.bf16.mxu0 %v1774
    %2610 = vmatmul.mubr.bf16.gmra.mrb[0].mxu0 %v1773
    %v2611 = vpop.f32.mrb[0].mxu0
    %v2612 = vadd.f32 %v1910, %v2611
    %v2613 = vpop.f32.mrb[0].mxu0
    %v2614 = vadd.f32 %v1914, %v2613
    %v2615 = vpop.f32.mrb[0].mxu0
    %v2616 = vadd.f32 %v1910, %v2615
    %v2617 = vpop.f32.mrb[0].mxu0
    %v2618 = vadd.f32 %v1914, %v2617
    %2619 = vdwg.mxu0
    %2620 = vmatprep.subr.bf16.mxu0 %v2376
    %2621 = vmatpush1.bf16.msra.mxu0 %v2375
    %2622 = vmatprep.subr.bf16.mxu0 %v2380
    %2623 = vmatpush1.bf16.msra.mxu0 %v2379
    %2624 = vmatprep.subr.bf16.mxu0 %v2384
    %2625 = vmatpush1.bf16.msra.mxu0 %v2383
    %2626 = vmatprep.subr.bf16.mxu0 %v2388
    %2627 = vmatpush1.bf16.msra.mxu0 %v2387
    %2628 = vmatprep.subr.bf16.mxu0 %v2392
    %2629 = vmatpush1.bf16.msra.mxu0 %v2391
    %2630 = vmatprep.subr.bf16.mxu0 %v2396
    %2631 = vmatpush1.bf16.msra.mxu0 %v2395
    %2632 = vmatprep.subr.bf16.mxu0 %v2400
    %2633 = vmatpush1.bf16.msra.mxu0 %v2399
    %2634 = vmatprep.subr.bf16.mxu0 %v2404
    %2635 = vmatpush1.bf16.msra.mxu0 %v2403
    %2636 = vmatprep.subr.bf16.mxu0 %v2408
    %2637 = vmatpush1.bf16.msra.mxu0 %v2407
    %2638 = vmatprep.subr.bf16.mxu0 %v2412
    %2639 = vmatpush1.bf16.msra.mxu0 %v2411
    %2640 = vmatprep.subr.bf16.mxu0 %v2416
    %2641 = vmatpush1.bf16.msra.mxu0 %v2415
    %2642 = vmatprep.subr.bf16.mxu0 %v2420
    %2643 = vmatpush1.bf16.msra.mxu0 %v2419
    %2644 = vmatprep.subr.bf16.mxu0 %v2424
    %2645 = vmatpush1.bf16.msra.mxu0 %v2423
    %2646 = vmatprep.subr.bf16.mxu0 %v2428
    %2647 = vmatpush1.bf16.msra.mxu0 %v2427
    %2648 = vmatprep.subr.bf16.mxu0 %v2432
    %2649 = vmatpush1.bf16.msra.mxu0 %v2431
    %2650 = vmatprep.subr.bf16.mxu0 %v2436
    %2651 = vmatpush1.bf16.msra.mxu0 %v2435
    %2652 = vmatprep.mubr.bf16.mxu0 %v1772
    %2653 = vmatmul.mubr.bf16.gmra.mrb[0].mxu0 %v1771
    %v2654 = vpop.f32.mrb[0].mxu0
    %v2655 = vadd.f32 %v2602, %v2654
    %v2656 = vpop.f32.mrb[0].mxu0
    %v2657 = vadd.f32 %v2604, %v2656
    %v2658 = vpop.f32.mrb[0].mxu0
    %v2659 = vadd.f32 %v2606, %v2658
    %v2660 = vpop.f32.mrb[0].mxu0
    %v2661 = vadd.f32 %v2608, %v2660
    %2662 = vmatprep.mubr.bf16.mxu0 %v1776
    %2663 = vmatmul.mubr.bf16.gmra.mrb[0].mxu0 %v1775
    %v2664 = vpop.f32.mrb[0].mxu0
    %v2665 = vadd.f32 %v2612, %v2664
    %v2666 = vpop.f32.mrb[0].mxu0
    %v2667 = vadd.f32 %v2614, %v2666
    %v2668 = vpop.f32.mrb[0].mxu0
    %v2669 = vadd.f32 %v2616, %v2668
    %v2670 = vpop.f32.mrb[0].mxu0
    %v2671 = vadd.f32 %v2618, %v2670
    %2672 = vdwg.mxu0
    %2673 = vmatprep.subr.bf16.mxu0 %v2314
    %2674 = vmatpush1.bf16.msra.mxu0 %v2313
    %2675 = vmatprep.subr.bf16.mxu0 %v2318
    %2676 = vmatpush1.bf16.msra.mxu0 %v2317
    %2677 = vmatprep.subr.bf16.mxu0 %v2322
    %2678 = vmatpush1.bf16.msra.mxu0 %v2321
    %2679 = vmatprep.subr.bf16.mxu0 %v2326
    %2680 = vmatpush1.bf16.msra.mxu0 %v2325
    %2681 = vmatprep.subr.bf16.mxu0 %v2330
    %2682 = vmatpush1.bf16.msra.mxu0 %v2329
    %2683 = vmatprep.subr.bf16.mxu0 %v2334
    %2684 = vmatpush1.bf16.msra.mxu0 %v2333
    %2685 = vmatprep.subr.bf16.mxu0 %v2338
    %2686 = vmatpush1.bf16.msra.mxu0 %v2337
    %2687 = vmatprep.subr.bf16.mxu0 %v2342
    %2688 = vmatpush1.bf16.msra.mxu0 %v2341
    %2689 = vmatprep.subr.bf16.mxu0 %v2346
    %2690 = vmatpush1.bf16.msra.mxu0 %v2345
    %2691 = vmatprep.subr.bf16.mxu0 %v2350
    %2692 = vmatpush1.bf16.msra.mxu0 %v2349
    %2693 = vmatprep.subr.bf16.mxu0 %v2354
    %2694 = vmatpush1.bf16.msra.mxu0 %v2353
    %2695 = vmatprep.subr.bf16.mxu0 %v2358
    %2696 = vmatpush1.bf16.msra.mxu0 %v2357
    %2697 = vmatprep.subr.bf16.mxu0 %v2362
    %2698 = vmatpush1.bf16.msra.mxu0 %v2361
    %2699 = vmatprep.subr.bf16.mxu0 %v2366
    %2700 = vmatpush1.bf16.msra.mxu0 %v2365
    %2701 = vmatprep.subr.bf16.mxu0 %v2370
    %2702 = vmatpush1.bf16.msra.mxu0 %v2369
    %2703 = vmatprep.subr.bf16.mxu0 %v2374
    %2704 = vmatpush1.bf16.msra.mxu0 %v2373
    %2705 = vmatprep.mubr.bf16.mxu0 %v1770
    %2706 = vmatmul.mubr.bf16.gmra.mrb[0].mxu0 %v1769
    %v2707 = vpop.f32.mrb[0].mxu0
    %v2708 = vadd.f32 %v1918, %v2707
    %v2709 = vpop.f32.mrb[0].mxu0
    %v2710 = vadd.f32 %v1922, %v2709
    %v2711 = vpop.f32.mrb[0].mxu0
    %v2712 = vadd.f32 %v1918, %v2711
    %v2713 = vpop.f32.mrb[0].mxu0
    %v2714 = vadd.f32 %v1922, %v2713
    %2715 = vmatprep.mubr.bf16.mxu0 %v1774
    %2716 = vmatmul.mubr.bf16.gmra.mrb[0].mxu0 %v1773
    %v2717 = vpop.f32.mrb[0].mxu0
    %v2718 = vadd.f32 %v1918, %v2717
    %v2719 = vpop.f32.mrb[0].mxu0
    %v2720 = vadd.f32 %v1922, %v2719
    %v2721 = vpop.f32.mrb[0].mxu0
    %v2722 = vadd.f32 %v1918, %v2721
    %v2723 = vpop.f32.mrb[0].mxu0
    %v2724 = vadd.f32 %v1922, %v2723
    %2725 = vdwg.mxu0
    %2726 = vmatprep.subr.bf16.mxu0 %v2378
    %2727 = vmatpush1.bf16.msra.mxu0 %v2377
    %2728 = vmatprep.subr.bf16.mxu0 %v2382
    %2729 = vmatpush1.bf16.msra.mxu0 %v2381
    %2730 = vmatprep.subr.bf16.mxu0 %v2386
    %2731 = vmatpush1.bf16.msra.mxu0 %v2385
    %2732 = vmatprep.subr.bf16.mxu0 %v2390
    %2733 = vmatpush1.bf16.msra.mxu0 %v2389
    %2734 = vmatprep.subr.bf16.mxu0 %v2394
    %2735 = vmatpush1.bf16.msra.mxu0 %v2393
    %2736 = vmatprep.subr.bf16.mxu0 %v2398
    %2737 = vmatpush1.bf16.msra.mxu0 %v2397
    %2738 = vmatprep.subr.bf16.mxu0 %v2402
    %2739 = vmatpush1.bf16.msra.mxu0 %v2401
    %2740 = vmatprep.subr.bf16.mxu0 %v2406
    %2741 = vmatpush1.bf16.msra.mxu0 %v2405
    %2742 = vmatprep.subr.bf16.mxu0 %v2410
    %2743 = vmatpush1.bf16.msra.mxu0 %v2409
    %2744 = vmatprep.subr.bf16.mxu0 %v2414
    %2745 = vmatpush1.bf16.msra.mxu0 %v2413
    %2746 = vmatprep.subr.bf16.mxu0 %v2418
    %2747 = vmatpush1.bf16.msra.mxu0 %v2417
    %2748 = vmatprep.subr.bf16.mxu0 %v2422
    %2749 = vmatpush1.bf16.msra.mxu0 %v2421
    %2750 = vmatprep.subr.bf16.mxu0 %v2426
    %2751 = vmatpush1.bf16.msra.mxu0 %v2425
    %2752 = vmatprep.subr.bf16.mxu0 %v2430
    %2753 = vmatpush1.bf16.msra.mxu0 %v2429
    %2754 = vmatprep.subr.bf16.mxu0 %v2434
    %2755 = vmatpush1.bf16.msra.mxu0 %v2433
    %2756 = vmatprep.subr.bf16.mxu0 %v2438
    %2757 = vmatpush1.bf16.msra.mxu0 %v2437
    %2758 = vmatprep.mubr.bf16.mxu0 %v1772
    %2759 = vmatmul.mubr.bf16.gmra.mrb[0].mxu0 %v1771
    %v2760 = vpop.f32.mrb[0].mxu0
    %v2761 = vadd.f32 %v2708, %v2760
    %v2762 = vpop.f32.mrb[0].mxu0
    %v2763 = vadd.f32 %v2710, %v2762
    %v2764 = vpop.f32.mrb[0].mxu0
    %v2765 = vadd.f32 %v2712, %v2764
    %v2766 = vpop.f32.mrb[0].mxu0
    %v2767 = vadd.f32 %v2714, %v2766
    %2768 = vmatprep.mubr.bf16.mxu0 %v1776
    %2769 = vmatmul.mubr.bf16.gmra.mrb[0].mxu0 %v1775
    %v2770 = vpop.f32.mrb[0].mxu0
    %v2771 = vadd.f32 %v2718, %v2770
    %v2772 = vpop.f32.mrb[0].mxu0
    %v2773 = vadd.f32 %v2720, %v2772
    %v2774 = vpop.f32.mrb[0].mxu0
    %v2775 = vadd.f32 %v2722, %v2774
    %v2776 = vpop.f32.mrb[0].mxu0
    %v2777 = vadd.f32 %v2724, %v2776
    %2778 = vdwg.mxu0
    %v2779 = vmax.f32 %v2655, 0.0
    %v2780 = vmax.f32 %v2657, 0.0
    %v2781 = vmax.f32 %v2761, 0.0
    %v2782 = vmax.f32 %v2763, 0.0
    %v2783 = vmax.f32 %v2659, 0.0
    %v2784 = vmax.f32 %v2661, 0.0
    %v2785 = vmax.f32 %v2765, 0.0
    %v2786 = vmax.f32 %v2767, 0.0
    %v2787 = vmax.f32 %v2665, 0.0
    %v2788 = vmax.f32 %v2667, 0.0
    %v2789 = vmax.f32 %v2771, 0.0
    %v2790 = vmax.f32 %v2773, 0.0
    %v2791 = vmax.f32 %v2669, 0.0
    %v2792 = vmax.f32 %v2671, 0.0
    %v2793 = vmax.f32 %v2775, 0.0
    %v2794 = vmax.f32 %v2777, 0.0
    %v2795 = vpack.c.bf16 %v2783, %v2779
    %v2796 = vpack.c.bf16 %v2784, %v2780
    %v2797 = vpack.c.bf16 %v2785, %v2781
    %v2798 = vpack.c.bf16 %v2786, %v2782
    %v2799 = vpack.c.bf16 %v2791, %v2787
    %v2800 = vpack.c.bf16 %v2792, %v2788
    %v2801 = vpack.c.bf16 %v2793, %v2789
    %v2802 = vpack.c.bf16 %v2794, %v2790
    %v2803 = vld [vmem:[#allocation7] sm:$0xf]
    %v2804 = vld [vmem:[#allocation7 + $0x4] sm:$0xf]
    %v2805 = vld [vmem:[#allocation7 + $0x8] sm:$0xf]
    %v2806 = vld [vmem:[#allocation7 + $0xc] sm:$0xf]
    %v2807 = vld [vmem:[#allocation7 + $0x10] sm:$0xf]
    %v2808 = vld [vmem:[#allocation7 + $0x14] sm:$0xf]
    %v2809 = vld [vmem:[#allocation7 + $0x18] sm:$0xf]
    %v2810 = vld [vmem:[#allocation7 + $0x1c] sm:$0xf]
    %v2811 = vld [vmem:[#allocation7 + $0x20] sm:$0xf]
    %v2812 = vld [vmem:[#allocation7 + $0x24] sm:$0xf]
    %v2813 = vld [vmem:[#allocation7 + $0x28] sm:$0xf]
    %v2814 = vld [vmem:[#allocation7 + $0x2c] sm:$0xf]
    %v2815 = vld [vmem:[#allocation7 + $0x30] sm:$0xf]
    %v2816 = vld [vmem:[#allocation7 + $0x34] sm:$0xf]
    %v2817 = vld [vmem:[#allocation7 + $0x38] sm:$0xf]
    %v2818 = vld [vmem:[#allocation7 + $0x3c] sm:$0xf]
    %v2819 = vld [vmem:[#allocation7 + $0x40] sm:$0xf]
    %v2820 = vld [vmem:[#allocation7 + $0x44] sm:$0xf]
    %v2821 = vld [vmem:[#allocation7 + $0x48] sm:$0xf]
    %v2822 = vld [vmem:[#allocation7 + $0x4c] sm:$0xf]
    %v2823 = vld [vmem:[#allocation7 + $0x50] sm:$0xf]
    %v2824 = vld [vmem:[#allocation7 + $0x54] sm:$0xf]
    %v2825 = vld [vmem:[#allocation7 + $0x58] sm:$0xf]
    %v2826 = vld [vmem:[#allocation7 + $0x5c] sm:$0xf]
    %v2827 = vld [vmem:[#allocation7 + $0x60] sm:$0xf]
    %v2828 = vld [vmem:[#allocation7 + $0x64] sm:$0xf]
    %v2829 = vld [vmem:[#allocation7 + $0x68] sm:$0xf]
    %v2830 = vld [vmem:[#allocation7 + $0x6c] sm:$0xf]
    %v2831 = vld [vmem:[#allocation7 + $0x70] sm:$0xf]
    %v2832 = vld [vmem:[#allocation7 + $0x74] sm:$0xf]
    %v2833 = vld [vmem:[#allocation7 + $0x78] sm:$0xf]
    %v2834 = vld [vmem:[#allocation7 + $0x7c] sm:$0xf]
    %v2835 = vld [vmem:[#allocation7 + $0x80] sm:$0xf]
    %v2836 = vld [vmem:[#allocation7 + $0x84] sm:$0xf]
    %v2837 = vld [vmem:[#allocation7 + $0x88] sm:$0xf]
    %v2838 = vld [vmem:[#allocation7 + $0x8c] sm:$0xf]
    %v2839 = vld [vmem:[#allocation7 + $0x90] sm:$0xf]
    %v2840 = vld [vmem:[#allocation7 + $0x94] sm:$0xf]
    %v2841 = vld [vmem:[#allocation7 + $0x98] sm:$0xf]
    %v2842 = vld [vmem:[#allocation7 + $0x9c] sm:$0xf]
    %v2843 = vld [vmem:[#allocation7 + $0xa0] sm:$0xf]
    %v2844 = vld [vmem:[#allocation7 + $0xa4] sm:$0xf]
    %v2845 = vld [vmem:[#allocation7 + $0xa8] sm:$0xf]
    %v2846 = vld [vmem:[#allocation7 + $0xac] sm:$0xf]
    %v2847 = vld [vmem:[#allocation7 + $0xb0] sm:$0xf]
    %v2848 = vld [vmem:[#allocation7 + $0xb4] sm:$0xf]
    %v2849 = vld [vmem:[#allocation7 + $0xb8] sm:$0xf]
    %v2850 = vld [vmem:[#allocation7 + $0xbc] sm:$0xf]
    %v2851 = vld [vmem:[#allocation7 + $0xc0] sm:$0xf]
    %v2852 = vld [vmem:[#allocation7 + $0xc4] sm:$0xf]
    %v2853 = vld [vmem:[#allocation7 + $0xc8] sm:$0xf]
    %v2854 = vld [vmem:[#allocation7 + $0xcc] sm:$0xf]
    %v2855 = vld [vmem:[#allocation7 + $0xd0] sm:$0xf]
    %v2856 = vld [vmem:[#allocation7 + $0xd4] sm:$0xf]
    %v2857 = vld [vmem:[#allocation7 + $0xd8] sm:$0xf]
    %v2858 = vld [vmem:[#allocation7 + $0xdc] sm:$0xf]
    %v2859 = vld [vmem:[#allocation7 + $0xe0] sm:$0xf]
    %v2860 = vld [vmem:[#allocation7 + $0xe4] sm:$0xf]
    %v2861 = vld [vmem:[#allocation7 + $0xe8] sm:$0xf]
    %v2862 = vld [vmem:[#allocation7 + $0xec] sm:$0xf]
    %v2863 = vld [vmem:[#allocation7 + $0xf0] sm:$0xf]
    %v2864 = vld [vmem:[#allocation7 + $0xf4] sm:$0xf]
    %v2865 = vld [vmem:[#allocation7 + $0xf8] sm:$0xf]
    %v2866 = vld [vmem:[#allocation7 + $0xfc] sm:$0xf]
    %v2867 = vld [vmem:[%s6] sm:$0x1]
    %v2869 = vlaneseq
    %v2870 = vshrl.u32 %v2869, 7
    %v2871 = vsub.s32 0, %v2870
    %v2872 = vrot.slane %v2867, %v2871
    %v2938 = vunpack.c.l.b16 %v2803
    %v2939 = vunpack.c.l.b16 %v2804
    %v2940 = vunpack.c.l.b16 %v2805
    %v2941 = vunpack.c.l.b16 %v2806
    %v2942 = vunpack.c.l.b16 %v2807
    %v2943 = vunpack.c.l.b16 %v2808
    %v2944 = vunpack.c.l.b16 %v2809
    %v2945 = vunpack.c.l.b16 %v2810
    %v2946 = vunpack.c.l.b16 %v2811
    %v2947 = vunpack.c.l.b16 %v2812
    %v2948 = vunpack.c.l.b16 %v2813
    %v2949 = vunpack.c.l.b16 %v2814
    %v2950 = vunpack.c.l.b16 %v2815
    %v2951 = vunpack.c.l.b16 %v2816
    %v2952 = vunpack.c.l.b16 %v2817
    %v2953 = vunpack.c.l.b16 %v2818
    %v2954 = vunpack.c.l.b16 %v2819
    %v2955 = vunpack.c.l.b16 %v2820
    %v2956 = vunpack.c.l.b16 %v2821
    %v2957 = vunpack.c.l.b16 %v2822
    %v2958 = vunpack.c.l.b16 %v2823
    %v2959 = vunpack.c.l.b16 %v2824
    %v2960 = vunpack.c.l.b16 %v2825
    %v2961 = vunpack.c.l.b16 %v2826
    %v2962 = vunpack.c.l.b16 %v2827
    %v2963 = vunpack.c.l.b16 %v2828
    %v2964 = vunpack.c.l.b16 %v2829
    %v2965 = vunpack.c.l.b16 %v2830
    %v2966 = vunpack.c.l.b16 %v2831
    %v2967 = vunpack.c.l.b16 %v2832
    %v2968 = vunpack.c.l.b16 %v2833
    %v2969 = vunpack.c.l.b16 %v2834
    %v2970 = vunpack.c.l.b16 %v2835
    %v2971 = vunpack.c.l.b16 %v2836
    %v2972 = vunpack.c.l.b16 %v2837
    %v2973 = vunpack.c.l.b16 %v2838
    %v2974 = vunpack.c.l.b16 %v2839
    %v2975 = vunpack.c.l.b16 %v2840
    %v2976 = vunpack.c.l.b16 %v2841
    %v2977 = vunpack.c.l.b16 %v2842
    %v2978 = vunpack.c.l.b16 %v2843
    %v2979 = vunpack.c.l.b16 %v2844
    %v2980 = vunpack.c.l.b16 %v2845
    %v2981 = vunpack.c.l.b16 %v2846
    %v2982 = vunpack.c.l.b16 %v2847
    %v2983 = vunpack.c.l.b16 %v2848
    %v2984 = vunpack.c.l.b16 %v2849
    %v2985 = vunpack.c.l.b16 %v2850
    %v2986 = vunpack.c.l.b16 %v2851
    %v2987 = vunpack.c.l.b16 %v2852
    %v2988 = vunpack.c.l.b16 %v2853
    %v2989 = vunpack.c.l.b16 %v2854
    %v2990 = vunpack.c.l.b16 %v2855
    %v2991 = vunpack.c.l.b16 %v2856
    %v2992 = vunpack.c.l.b16 %v2857
    %v2993 = vunpack.c.l.b16 %v2858
    %v2994 = vunpack.c.l.b16 %v2859
    %v2995 = vunpack.c.l.b16 %v2860
    %v2996 = vunpack.c.l.b16 %v2861
    %v2997 = vunpack.c.l.b16 %v2862
    %v2998 = vunpack.c.l.b16 %v2863
    %v2999 = vunpack.c.l.b16 %v2864
    %v3000 = vunpack.c.l.b16 %v2865
    %v3001 = vunpack.c.l.b16 %v2866
    %v3002 = vpack.c.b16 %v2939, %v2938
    %v3003 = vpack.c.b16 %v2941, %v2940
    %v3004 = vpack.c.b16 %v2943, %v2942
    %v3005 = vpack.c.b16 %v2945, %v2944
    %v3006 = vpack.c.b16 %v2947, %v2946
    %v3007 = vpack.c.b16 %v2949, %v2948
    %v3008 = vpack.c.b16 %v2951, %v2950
    %v3009 = vpack.c.b16 %v2953, %v2952
    %v3010 = vpack.c.b16 %v2955, %v2954
    %v3011 = vpack.c.b16 %v2957, %v2956
    %v3012 = vpack.c.b16 %v2959, %v2958
    %v3013 = vpack.c.b16 %v2961, %v2960
    %v3014 = vpack.c.b16 %v2963, %v2962
    %v3015 = vpack.c.b16 %v2965, %v2964
    %v3016 = vpack.c.b16 %v2967, %v2966
    %v3017 = vpack.c.b16 %v2969, %v2968
    %v3018 = vpack.c.b16 %v2971, %v2970
    %v3019 = vpack.c.b16 %v2973, %v2972
    %v3020 = vpack.c.b16 %v2975, %v2974
    %v3021 = vpack.c.b16 %v2977, %v2976
    %v3022 = vpack.c.b16 %v2979, %v2978
    %v3023 = vpack.c.b16 %v2981, %v2980
    %v3024 = vpack.c.b16 %v2983, %v2982
    %v3025 = vpack.c.b16 %v2985, %v2984
    %v3026 = vpack.c.b16 %v2987, %v2986
    %v3027 = vpack.c.b16 %v2989, %v2988
    %v3028 = vpack.c.b16 %v2991, %v2990
    %v3029 = vpack.c.b16 %v2993, %v2992
    %v3030 = vpack.c.b16 %v2995, %v2994
    %v3031 = vpack.c.b16 %v2997, %v2996
    %v3032 = vpack.c.b16 %v2999, %v2998
    %v3033 = vpack.c.b16 %v3001, %v3000
    %3066 = vmatprep.subr.bf16.mxu0 0
    %3067 = vmatpush1.bf16.msra.mxu0 %v3002
    %3068 = vmatprep.subr.bf16.mxu0 0
    %3069 = vmatpush1.bf16.msra.mxu0 %v3003
    %3070 = vmatprep.subr.bf16.mxu0 0
    %3071 = vmatpush1.bf16.msra.mxu0 %v3004
    %3072 = vmatprep.subr.bf16.mxu0 0
    %3073 = vmatpush1.bf16.msra.mxu0 %v3005
    %3074 = vmatprep.subr.bf16.mxu0 0
    %3075 = vmatpush1.bf16.msra.mxu0 %v3006
    %3076 = vmatprep.subr.bf16.mxu0 0
    %3077 = vmatpush1.bf16.msra.mxu0 %v3007
    %3078 = vmatprep.subr.bf16.mxu0 0
    %3079 = vmatpush1.bf16.msra.mxu0 %v3008
    %3080 = vmatprep.subr.bf16.mxu0 0
    %3081 = vmatpush1.bf16.msra.mxu0 %v3009
    %3082 = vmatprep.subr.bf16.mxu0 0
    %3083 = vmatpush1.bf16.msra.mxu0 %v3010
    %3084 = vmatprep.subr.bf16.mxu0 0
    %3085 = vmatpush1.bf16.msra.mxu0 %v3011
    %3086 = vmatprep.subr.bf16.mxu0 0
    %3087 = vmatpush1.bf16.msra.mxu0 %v3012
    %3088 = vmatprep.subr.bf16.mxu0 0
    %3089 = vmatpush1.bf16.msra.mxu0 %v3013
    %3090 = vmatprep.subr.bf16.mxu0 0
    %3091 = vmatpush1.bf16.msra.mxu0 %v3014
    %3092 = vmatprep.subr.bf16.mxu0 0
    %3093 = vmatpush1.bf16.msra.mxu0 %v3015
    %3094 = vmatprep.subr.bf16.mxu0 0
    %3095 = vmatpush1.bf16.msra.mxu0 %v3016
    %3096 = vmatprep.subr.bf16.mxu0 0
    %3097 = vmatpush1.bf16.msra.mxu0 %v3017
    %3098 = vmatprep.mubr.bf16.mxu0 %v2796
    %3099 = vmatmul.mubr.bf16.gmra.mrb[0].mxu0 %v2795
    %v3100 = vpop.f32.mrb[0].mxu0
    %v3101 = vadd.f32 %v2872, %v3100
    %v3102 = vpop.f32.mrb[0].mxu0
    %v3103 = vpop.f32.mrb[0].mxu0
    %v3104 = vadd.f32 %v2872, %v3103
    %v3105 = vpop.f32.mrb[0].mxu0
    %3106 = vmatprep.mubr.bf16.mxu0 %v2800
    %3107 = vmatmul.mubr.bf16.gmra.mrb[0].mxu0 %v2799
    %v3108 = vpop.f32.mrb[0].mxu0
    %v3109 = vadd.f32 %v2872, %v3108
    %v3110 = vpop.f32.mrb[0].mxu0
    %v3111 = vpop.f32.mrb[0].mxu0
    %v3112 = vadd.f32 %v2872, %v3111
    %v3113 = vpop.f32.mrb[0].mxu0
    %3114 = vdwg.mxu0
    %3115 = vmatprep.subr.bf16.mxu0 0
    %3116 = vmatpush1.bf16.msra.mxu0 %v3018
    %3117 = vmatprep.subr.bf16.mxu0 0
    %3118 = vmatpush1.bf16.msra.mxu0 %v3019
    %3119 = vmatprep.subr.bf16.mxu0 0
    %3120 = vmatpush1.bf16.msra.mxu0 %v3020
    %3121 = vmatprep.subr.bf16.mxu0 0
    %3122 = vmatpush1.bf16.msra.mxu0 %v3021
    %3123 = vmatprep.subr.bf16.mxu0 0
    %3124 = vmatpush1.bf16.msra.mxu0 %v3022
    %3125 = vmatprep.subr.bf16.mxu0 0
    %3126 = vmatpush1.bf16.msra.mxu0 %v3023
    %3127 = vmatprep.subr.bf16.mxu0 0
    %3128 = vmatpush1.bf16.msra.mxu0 %v3024
    %3129 = vmatprep.subr.bf16.mxu0 0
    %3130 = vmatpush1.bf16.msra.mxu0 %v3025
    %3131 = vmatprep.subr.bf16.mxu0 0
    %3132 = vmatpush1.bf16.msra.mxu0 %v3026
    %3133 = vmatprep.subr.bf16.mxu0 0
    %3134 = vmatpush1.bf16.msra.mxu0 %v3027
    %3135 = vmatprep.subr.bf16.mxu0 0
    %3136 = vmatpush1.bf16.msra.mxu0 %v3028
    %3137 = vmatprep.subr.bf16.mxu0 0
    %3138 = vmatpush1.bf16.msra.mxu0 %v3029
    %3139 = vmatprep.subr.bf16.mxu0 0
    %3140 = vmatpush1.bf16.msra.mxu0 %v3030
    %3141 = vmatprep.subr.bf16.mxu0 0
    %3142 = vmatpush1.bf16.msra.mxu0 %v3031
    %3143 = vmatprep.subr.bf16.mxu0 0
    %3144 = vmatpush1.bf16.msra.mxu0 %v3032
    %3145 = vmatprep.subr.bf16.mxu0 0
    %3146 = vmatpush1.bf16.msra.mxu0 %v3033
    %3147 = vmatprep.mubr.bf16.mxu0 %v2798
    %3148 = vmatmul.mubr.bf16.gmra.mrb[0].mxu0 %v2797
    %v3149 = vpop.f32.mrb[0].mxu0
    %v3150 = vadd.f32 %v3101, %v3149
    %v3151 = vpop.f32.mrb[0].mxu0
    %v3152 = vpop.f32.mrb[0].mxu0
    %v3153 = vadd.f32 %v3104, %v3152
    %v3154 = vpop.f32.mrb[0].mxu0
    %3155 = vmatprep.mubr.bf16.mxu0 %v2802
    %3156 = vmatmul.mubr.bf16.gmra.mrb[0].mxu0 %v2801
    %v3157 = vpop.f32.mrb[0].mxu0
    %v3158 = vadd.f32 %v3109, %v3157
    %v3159 = vpop.f32.mrb[0].mxu0
    %v3160 = vpop.f32.mrb[0].mxu0
    %v3161 = vadd.f32 %v3112, %v3160
    %v3162 = vpop.f32.mrb[0].mxu0
    %3163 = vdwg.mxu0
    %3164 = vst [vmem:[%s7] sm:$0xff] %v3150
    %3165 = vst [vmem:[%s7 + $0x8] sm:$0xff] %v3153
    %3166 = vst [vmem:[%s7 + $0x10] sm:$0xff] %v3158
    %3167 = vst [vmem:[%s7 + $0x18] sm:$0xff] %v3161
    // Predicated region
    $region46: #{mlp_forward.1} parent=1 // pred_check
      _
    $region47: #{mlp_forward.1} parent=1 // pred_check_branch
      %3169 = sbr.rel (0) target = $region49
    $region48: #{mlp_forward.1} parent=1 // pred_region
      _
    $region49: #{mlp_forward.1} parent=1 // pred_fallthru
      _
    // Predicated region
    $region50: #{mlp_forward.1} parent=1 // pred_check
      _
    $region51: #{mlp_forward.1} parent=1 // pred_check_branch
      %3171 = sbr.rel (0) target = $region53
    $region52: #{mlp_forward.1} parent=1 // pred_region
      _
    $region53: #{mlp_forward.1} parent=1 // pred_fallthru
      _
    %3172 = vsyncpa [#allocation3], 1
    %3173 = vsyncpa [#allocation5], 1
    %3174 = vsyncpa [#allocation8], 1

</llo_original>
